<compile_context>
chip_gen: v7x
topology: tpu7x:2x2x1
jax: 0.10.0
libtpu: 0.0.40
codegen_flags: <defaults>
</compile_context>

<pallas_src>
import functools

import jax
import jax.numpy as jnp
from jax.experimental import pallas as pl
from jax.experimental.pallas import tpu as pltpu

EPS = 1e-5


def _round_up(n, m):
    return ((n + m - 1) // m) * m


# ----------------------------------------------------------------------------
# Kernels
# ----------------------------------------------------------------------------
def _bn_stats1_kernel(x_ref, w1_ref, out_ref, *, q_rows, n3, ragged):
    """Pass A: per-tile partial [sum(h1) | sum(h1^2)] of h1 = conv1(x)."""
    h = jnp.dot(x_ref[...], w1_ref[...], preferred_element_type=jnp.float32)
    if ragged:  # zero rows past the true row count (ragged last tile)
        rows = (jax.lax.broadcasted_iota(jnp.int32, (h.shape[0], 1), 0)
                + pl.program_id(0) * h.shape[0])
        h = jnp.where(rows < q_rows, h, 0.0)
    # Column sums on the MXU (ones @ h) instead of axis-0 VALU reductions.
    ones = jnp.ones((8, h.shape[0]), jnp.float32)
    out_ref[0, :, :n3] = jnp.dot(ones, h, preferred_element_type=jnp.float32)
    out_ref[0, :, n3:] = jnp.dot(ones, h * h, preferred_element_type=jnp.float32)


def _bn_stats2_kernel(ab_ref, x_ref, w1_ref, w2_ref, s1_ref, t1_ref, out_ref,
                      *, q_rows, n3, ragged):
    """Pass B: partial [sum(h2) | sum(h2^2)], h2 = conv2(prelu1(bn1(conv1 x)))."""
    a1 = ab_ref[0:1, 0:1]
    h = jnp.dot(x_ref[...], w1_ref[...], preferred_element_type=jnp.float32)
    if ragged:
        rows = (jax.lax.broadcasted_iota(jnp.int32, (h.shape[0], 1), 0)
                + pl.program_id(0) * h.shape[0])
        h = jnp.where(rows < q_rows, h, 0.0)
    g = h * s1_ref[...] + t1_ref[...]
    g = jnp.where(g >= 0.0, g, a1 * g)
    h2 = jnp.dot(g.astype(w2_ref.dtype), w2_ref[...],
                 preferred_element_type=jnp.float32)
    if ragged:  # masked rows produced prelu(shift1) != 0 -> exclude from sums
        h2 = jnp.where(rows < q_rows, h2, 0.0)
    ones = jnp.ones((8, h2.shape[0]), jnp.float32)
    out_ref[0, :, :n3] = jnp.dot(ones, h2, preferred_element_type=jnp.float32)
    out_ref[0, :, n3:] = jnp.dot(ones, h2 * h2, preferred_element_type=jnp.float32)


def _apply_kernel(ab_ref, x_ref, w1_ref, wd_ref, w2_ref,
                  s1_ref, t1_ref, s2_ref, t2_ref, out_ref, *, cp, cout):
    """Pass C: full fused chain + 3-way lane-group max pool for one row tile."""
    a1 = ab_ref[0:1, 0:1]
    a2 = ab_ref[0:1, 1:2]
    x = x_ref[...]
    h = jnp.dot(x, w1_ref[...], preferred_element_type=jnp.float32)
    g = h * s1_ref[...] + t1_ref[...]                       # bn1 (folded affine)
    g = jnp.where(g >= 0.0, g, a1 * g)                      # prelu1
    h2 = jnp.dot(g.astype(w2_ref.dtype), w2_ref[...],       # conv2
                 preferred_element_type=jnp.float32)
    # downsample residual recomputed late (MXU slack) to keep its live range short
    res = jnp.dot(x, wd_ref[...], preferred_element_type=jnp.float32)
    y = h2 * s2_ref[...] + t2_ref[...] + res                # bn2 + residual
    y = jnp.where(y >= 0.0, y, a2 * y)                      # prelu2
    # MaxPool1d(3): the three pool positions are the three 128-aligned lane
    # groups -> pure VALU max on whole vregs.
    p = jnp.maximum(jnp.maximum(y[:, :cp], y[:, cp:2 * cp]), y[:, 2 * cp:3 * cp])
    out_ref[...] = p[:, :cout]                               # unpadded writeback


# ----------------------------------------------------------------------------
# Wrapper (channels-last core)
# ----------------------------------------------------------------------------
@functools.partial(jax.jit, static_argnames=("matmul_dtype", "row_tile"))
def resblock_forward_nlc(x_blc, params, matmul_dtype=jnp.bfloat16, row_tile=1024):
    """Channels-last ResBlock: x (B, L, Cin) -> (B, L//3, Cout).

    matmul inputs use `matmul_dtype` (bf16 default, all generations); BN stats,
    affine, PReLU and accumulation stay float32.
    """
    B, L, Cin = x_blc.shape
    Cout = params["w1"].shape[0]
    Lout = L // 3
    assert Lout >= 1, "need at least one full MaxPool1d(3) window"
    Q = B * Lout
    Cp = _round_up(Cout, 128)        # lane-padded per-position output group
    N3 = 3 * Cp
    K3 = 3 * Cin
    count = jnp.float32(B * L)       # true BN divisor (head + tail positions)

    # Packed rows: row (b, j) = [x[b,3j,:], x[b,3j+1,:], x[b,3j+2,:]]  (free view)
    x3 = x_blc[:, :3 * Lout, :].reshape(Q, K3).astype(matmul_dtype)

    # Block-diagonal (per pool-position) weights; no K-dim padding in HBM.
    w1t = params["w1"].T.astype(matmul_dtype)                        # (Cin, Cout)
    w2t = params["w2"].T.astype(matmul_dtype)                        # (Cout, Cout)
    if "wd" in params:
        wdt = params["wd"].T.astype(matmul_dtype)                    # (Cin, Cout)
    else:                                                            # identity residual
        wdt = jnp.eye(Cin, Cout, dtype=matmul_dtype)

    def bdiag(wt, kin, kstride):
        out = jnp.zeros((3 * kstride, N3), matmul_dtype)
        for r in range(3):
            out = out.at[r * kstride:r * kstride + kin,
                         r * Cp:r * Cp + Cout].set(wt)
        return out

    w1b = bdiag(w1t, Cin, Cin)        # (K3, N3)
    wdb = bdiag(wdt, Cin, Cin)        # (K3, N3)
    w2b = bdiag(w2t, Cout, Cp)        # (N3, N3)

    ab = jnp.stack([params["a1"], params["a2"]]).astype(jnp.float32).reshape(1, 2)

    # ---- row tile / VMEM budget per generation ------------------------------
    try:
        vmem_cap = int(pltpu.get_tpu_info().vmem_capacity_bytes)
    except Exception:
        vmem_cap = 64 << 20                      # conservative (v7x physical)
    budget = int(vmem_cap * 0.7)                 # leave headroom for scratch/buffers
    isz = jnp.dtype(matmul_dtype).itemsize
    weight_bytes = (w1b.size + wdb.size + w2b.size) * isz + 4 * N3 * 4
    per_row = 2 * K3 * isz + 6 * N3 * 4          # double-buffered x + f32 intermediates
    avail = max(budget - weight_bytes - (4 << 20), 1 << 20)
    cand = min(int(row_tile), int(avail // per_row))
    cand = max(8, (cand // 8) * 8)
    TQ = Q if Q <= cand else cand                # whole-Q tile, or multiple-of-8 tiles
    grid = (pl.cdiv(Q, TQ),)
    nt = grid[0]
    ragged = (Q % TQ) != 0

    cparams = pltpu.CompilerParams(dimension_semantics=("parallel",),
                                   vmem_limit_bytes=budget)

    x_spec = pl.BlockSpec((TQ, K3), lambda i: (i, 0))
    w1_spec = pl.BlockSpec((K3, N3), lambda i: (0, 0))
    w2_spec = pl.BlockSpec((N3, N3), lambda i: (0, 0))
    vec_spec = pl.BlockSpec((1, N3), lambda i: (0, 0))
    ab_spec = pl.BlockSpec((1, 2), lambda i: (0, 0))
    sums_shape = jax.ShapeDtypeStruct((nt, 8, 2 * N3), jnp.float32)
    sums_spec = pl.BlockSpec((1, 8, 2 * N3), lambda i: (i, 0, 0))

    # ---- pass A: BN1 statistics ---------------------------------------------
    sums1_t = pl.pallas_call(
        functools.partial(_bn_stats1_kernel, q_rows=Q, n3=N3, ragged=ragged),
        out_shape=sums_shape,
        grid=grid,
        in_specs=[x_spec, w1_spec],
        out_specs=sums_spec,
        compiler_params=cparams,
    )(x3, w1b)
    sums1 = jnp.sum(sums1_t, axis=0)[0]           # (2*N3,)

    def group_reduce(sums_vec):
        s = sums_vec[:N3].reshape(3, Cp).sum(axis=0)[:Cout]
        sq = sums_vec[N3:].reshape(3, Cp).sum(axis=0)[:Cout]
        return s, sq

    s1, sq1 = group_reduce(sums1)

    # Tail positions (l >= 3*Lout) feed BN statistics but not the pooled output;
    # they are at most 2*B rows -> handled with plain XLA ops.
    has_tail = L > 3 * Lout
    if has_tail:
        xt = x_blc[:, 3 * Lout:, :].reshape(-1, Cin).astype(matmul_dtype)
        h1t = jnp.dot(xt, w1t, preferred_element_type=jnp.float32)
        s1 = s1 + jnp.sum(h1t, axis=0)
        sq1 = sq1 + jnp.sum(h1t * h1t, axis=0)

    def finalize(s, sq, gamma, beta):
        mu = s / count
        var = jnp.maximum(sq / count - mu * mu, 0.0)
        scale = gamma.astype(jnp.float32) * jax.lax.rsqrt(var + EPS)
        shift = beta.astype(jnp.float32) - mu * scale
        return scale, shift

    def tile3(v):                                  # (Cout,) -> (1, N3) padded x3
        vp = jnp.zeros((Cp,), jnp.float32).at[:Cout].set(v)
        return jnp.tile(vp, 3).reshape(1, N3)

    scale1, shift1 = finalize(s1, sq1, params["bn1_g"], params["bn1_b"])
    sc1, sh1 = tile3(scale1), tile3(shift1)

    # ---- pass B: BN2 statistics ---------------------------------------------
    sums2_t = pl.pallas_call(
        functools.partial(_bn_stats2_kernel, q_rows=Q, n3=N3, ragged=ragged),
        out_shape=sums_shape,
        grid=grid,
        in_specs=[ab_spec, x_spec, w1_spec, w2_spec, vec_spec, vec_spec],
        out_specs=sums_spec,
        compiler_params=cparams,
    )(ab, x3, w1b, w2b, sc1, sh1)
    sums2 = jnp.sum(sums2_t, axis=0)[0]
    s2, sq2 = group_reduce(sums2)

    if has_tail:
        a1f = params["a1"].astype(jnp.float32)
        gt = h1t * scale1 + shift1
        gt = jnp.where(gt >= 0.0, gt, a1f * gt)
        h2t = jnp.dot(gt.astype(matmul_dtype), w2t,
                      preferred_element_type=jnp.float32)
        s2 = s2 + jnp.sum(h2t, axis=0)
        sq2 = sq2 + jnp.sum(h2t * h2t, axis=0)

    scale2, shift2 = finalize(s2, sq2, params["bn2_g"], params["bn2_b"])
    sc2, sh2 = tile3(scale2), tile3(shift2)

    # ---- pass C: apply + residual + prelu2 + maxpool -------------------------
    out2d = pl.pallas_call(
        functools.partial(_apply_kernel, cp=Cp, cout=Cout),
        out_shape=jax.ShapeDtypeStruct((Q, Cout), jnp.float32),
        grid=grid,
        in_specs=[ab_spec, x_spec, w1_spec, w1_spec, w2_spec,
                  vec_spec, vec_spec, vec_spec, vec_spec],
        out_specs=pl.BlockSpec((TQ, Cout), lambda i: (i, 0)),
        compiler_params=cparams,
    )(ab, x3, w1b, wdb, w2b, sc1, sh1, sc2, sh2)

    return out2d.reshape(B, Lout, Cout)


def resblock_forward(x_ncl, params, matmul_dtype=jnp.bfloat16):
    """PyTorch-convention adapter: (B, Cin, L) -> (B, Cout, L//3).

    The transposes exist only to adapt the NCL convention; channels-last callers
    should use `resblock_forward_nlc` directly and skip both HBM passes.
    """
    x_blc = jnp.transpose(x_ncl, (0, 2, 1))
    out = resblock_forward_nlc(x_blc, params, matmul_dtype=matmul_dtype)
    return jnp.transpose(out, (0, 2, 1))


# ----------------------------------------------------------------------------
# Pure-JAX reference (mirrors the PyTorch forward in training mode)
# ----------------------------------------------------------------------------
def resblock_reference(x_ncl, params):
    B, Cin, L = x_ncl.shape
    Cout = params["w1"].shape[0]
    Lout = L // 3

    def bn(h, g, b):  # h: (B, Cout, L)
        mu = jnp.mean(h, axis=(0, 2), keepdims=True)
        var = jnp.mean((h - mu) ** 2, axis=(0, 2), keepdims=True)
        return (h - mu) * jax.lax.rsqrt(var + EPS) * g.reshape(1, -1, 1) \
            + b.reshape(1, -1, 1)

    def prelu(h, a):
        return jnp.where(h >= 0.0, h, a * h)

    h = jnp.einsum("oc,bcl->bol", params["w1"], x_ncl)
    h = prelu(bn(h, params["bn1_g"], params["bn1_b"]), params["a1"])
    h = jnp.einsum("oc,bcl->bol", params["w2"], h)
    h = bn(h, params["bn2_g"], params["bn2_b"])
    res = jnp.einsum("oc,bcl->bol", params["wd"], x_ncl)
    h = prelu(h + res, params["a2"])
    h = h[:, :, :Lout * 3].reshape(B, Cout, Lout, 3)
    return jnp.max(h, axis=-1)


if __name__ == "__main__":
    B, Cin, Cout, L = 2, 4, 8, 24

    key = jax.random.PRNGKey(0)
    k = jax.random.split(key, 8)
    params = {
        "w1": jax.random.normal(k[0], (Cout, Cin), jnp.float32) * 0.3,
        "w2": jax.random.normal(k[1], (Cout, Cout), jnp.float32) * 0.3,
        "wd": jax.random.normal(k[2], (Cout, Cin), jnp.float32) * 0.3,
        "bn1_g": 1.0 + 0.1 * jax.random.normal(k[3], (Cout,), jnp.float32),
        "bn1_b": 0.1 * jax.random.normal(k[4], (Cout,), jnp.float32),
        "bn2_g": 1.0 + 0.1 * jax.random.normal(k[5], (Cout,), jnp.float32),
        "bn2_b": 0.1 * jax.random.normal(k[6], (Cout,), jnp.float32),
        "a1": jnp.float32(0.25),   # nn.PReLU() default init
        "a2": jnp.float32(0.25),
    }
    x = jax.random.normal(k[7], (B, Cin, L), jnp.float32)

    ref = jax.block_until_ready(resblock_reference(x, params))

    # f32 matmul path: exact module semantics, tight tolerance.
    out = jax.block_until_ready(
        resblock_forward(x, params, matmul_dtype=jnp.float32))
    assert out.shape == (B, Cout, L // 3), out.shape
    assert jnp.allclose(out, ref, rtol=1e-4, atol=1e-4), \
        f"f32 max abs err {jnp.max(jnp.abs(out - ref))}"

    # bf16 MXU-input default path (all generations): matmul inputs rounded to
    # bf16, BN/stat/elementwise math stays f32 -> looser tolerance vs f32 ref.
    out_bf16 = jax.block_until_ready(resblock_forward(x, params))
    assert out_bf16.shape == (B, Cout, L // 3), out_bf16.shape
    assert jnp.allclose(out_bf16, ref, rtol=1e-1, atol=1e-1), \
        f"bf16 max abs err {jnp.max(jnp.abs(out_bf16 - ref))}"

    print("KERNEL_OK")
</pallas_src>

<mosaic_0001>
module attributes {stable_mosaic.version = 11 : i64} {
  func.func @_bn_stats1_kernel(%arg0: i32, %arg1: memref<16x12xf32, #tpu.memory_space<vmem>>, %arg2: memref<12x384xf32, #tpu.memory_space<vmem>>, %arg3: memref<1x8x768xf32, #tpu.memory_space<vmem>>) attributes {dimension_semantics = [#tpu.dimension_semantics<parallel>], iteration_bounds = array<i64: 1>, scalar_prefetch = 0 : i64, scratch_operands = 0 : i64, tpu.core_type = #tpu.core_type<tc>, window_params = [{transform_indices = @transform_0, window_bounds = array<i64: 16, 12>}, {pipeline_mode = #tpu.pipeline_mode<synchronous>, transform_indices = @transform_1, window_bounds = array<i64: 12, 384>}, {transform_indices = @transform_2, window_bounds = array<i64: 1, 8, 768>}]} {
    %c0 = arith.constant 0 : index
    %c0_0 = arith.constant 0 : index
    %0 = vector.load %arg1[%c0, %c0_0] : memref<16x12xf32, #tpu.memory_space<vmem>>, vector<16x12xf32>
    %c0_1 = arith.constant 0 : index
    %c0_2 = arith.constant 0 : index
    %1 = vector.load %arg2[%c0_1, %c0_2] : memref<12x384xf32, #tpu.memory_space<vmem>>, vector<12x384xf32>
    %cst = arith.constant dense<0.000000e+00> : vector<16x384xf32>
    %2 = tpu.matmul %0, %1, %cst {dimension_numbers = #tpu.dot_dimension_numbers<[1], [0], [0], [1], [0, 0, 1, 1], [], []>} : vector<16x12xf32>, vector<12x384xf32>, vector<16x384xf32> -> vector<16x384xf32>
    %cst_3 = arith.constant 1.000000e+00 : f32
    %3 = vector.broadcast %cst_3 : f32 to vector<8x16xf32>
    %cst_4 = arith.constant dense<0.000000e+00> : vector<8x384xf32>
    %4 = tpu.matmul %3, %2, %cst_4 {dimension_numbers = #tpu.dot_dimension_numbers<[1], [0], [0], [1], [0, 0, 1, 1], [], []>} : vector<8x16xf32>, vector<16x384xf32>, vector<8x384xf32> -> vector<8x384xf32>
    %c0_5 = arith.constant 0 : index
    %c0_6 = arith.constant 0 : index
    %c0_7 = arith.constant 0 : index
    %5 = vector.load %arg3[%c0_5, %c0_6, %c0_7] : memref<1x8x768xf32, #tpu.memory_space<vmem>>, vector<1x8x384xf32>
    %6 = vector.shape_cast %5 : vector<1x8x384xf32> to vector<8x384xf32>
    %7 = vector.shape_cast %4 : vector<8x384xf32> to vector<1x8x384xf32>
    tpu.vector_store %arg3[%c0_5, %c0_6, %c0_7], %7 {strides = array<i32>} : memref<1x8x768xf32, #tpu.memory_space<vmem>>, vector<1x8x384xf32>,
    %8 = arith.mulf %2, %2 : vector<16x384xf32>
    %cst_8 = arith.constant dense<0.000000e+00> : vector<8x384xf32>
    %9 = tpu.matmul %3, %8, %cst_8 {dimension_numbers = #tpu.dot_dimension_numbers<[1], [0], [0], [1], [0, 0, 1, 1], [], []>} : vector<8x16xf32>, vector<16x384xf32>, vector<8x384xf32> -> vector<8x384xf32>
    %c0_9 = arith.constant 0 : index
    %c0_10 = arith.constant 0 : index
    %c384 = arith.constant 384 : index
    %10 = vector.load %arg3[%c0_9, %c0_10, %c384] : memref<1x8x768xf32, #tpu.memory_space<vmem>>, vector<1x8x384xf32>
    %11 = vector.shape_cast %10 : vector<1x8x384xf32> to vector<8x384xf32>
    %12 = vector.shape_cast %9 : vector<8x384xf32> to vector<1x8x384xf32>
    tpu.vector_store %arg3[%c0_9, %c0_10, %c384], %12 {strides = array<i32>} : memref<1x8x768xf32, #tpu.memory_space<vmem>>, vector<1x8x384xf32>,
    return
  }
  func.func @transform_0(%arg0: i32) -> (i32, i32) {
    %c0_i32 = arith.constant 0 : i32
    %c0_i32_0 = arith.constant 0 : i32
    return %arg0, %c0_i32 : i32, i32
  }
  func.func @transform_1(%arg0: i32) -> (i32, i32) {
    %c0_i32 = arith.constant 0 : i32
    %c0_i32_0 = arith.constant 0 : i32
    %c0_i32_1 = arith.constant 0 : i32
    return %c0_i32, %c0_i32_0 : i32, i32
  }
  func.func @transform_2(%arg0: i32) -> (i32, i32, i32) {
    %c0_i32 = arith.constant 0 : i32
    %c0_i32_0 = arith.constant 0 : i32
    %c0_i32_1 = arith.constant 0 : i32
    return %arg0, %c0_i32, %c0_i32_0 : i32, i32, i32
  }
}

module attributes {stable_mosaic.version = 11 : i64} {
  func.func @_bn_stats2_kernel(%arg0: i32, %arg1: memref<1x2xf32, #tpu.memory_space<vmem>>, %arg2: memref<16x12xf32, #tpu.memory_space<vmem>>, %arg3: memref<12x384xf32, #tpu.memory_space<vmem>>, %arg4: memref<384x384xf32, #tpu.memory_space<vmem>>, %arg5: memref<1x384xf32, #tpu.memory_space<vmem>>, %arg6: memref<1x384xf32, #tpu.memory_space<vmem>>, %arg7: memref<1x8x768xf32, #tpu.memory_space<vmem>>) attributes {dimension_semantics = [#tpu.dimension_semantics<parallel>], iteration_bounds = array<i64: 1>, scalar_prefetch = 0 : i64, scratch_operands = 0 : i64, tpu.core_type = #tpu.core_type<tc>, window_params = [{pipeline_mode = #tpu.pipeline_mode<synchronous>, transform_indices = @transform_0, window_bounds = array<i64: 1, 2>}, {transform_indices = @transform_1, window_bounds = array<i64: 16, 12>}, {pipeline_mode = #tpu.pipeline_mode<synchronous>, transform_indices = @transform_2, window_bounds = array<i64: 12, 384>}, {pipeline_mode = #tpu.pipeline_mode<synchronous>, transform_indices = @transform_3, window_bounds = array<i64: 384, 384>}, {pipeline_mode = #tpu.pipeline_mode<synchronous>, transform_indices = @transform_4, window_bounds = array<i64: 1, 384>}, {pipeline_mode = #tpu.pipeline_mode<synchronous>, transform_indices = @transform_5, window_bounds = array<i64: 1, 384>}, {transform_indices = @transform_6, window_bounds = array<i64: 1, 8, 768>}]} {
    %c0 = arith.constant 0 : index
    %c0_0 = arith.constant 0 : index
    %0 = vector.load %arg1[%c0, %c0_0] : memref<1x2xf32, #tpu.memory_space<vmem>>, vector<1x1xf32>
    %c0_1 = arith.constant 0 : index
    %c0_2 = arith.constant 0 : index
    %1 = vector.load %arg2[%c0_1, %c0_2] : memref<16x12xf32, #tpu.memory_space<vmem>>, vector<16x12xf32>
    %c0_3 = arith.constant 0 : index
    %c0_4 = arith.constant 0 : index
    %2 = vector.load %arg3[%c0_3, %c0_4] : memref<12x384xf32, #tpu.memory_space<vmem>>, vector<12x384xf32>
    %cst = arith.constant dense<0.000000e+00> : vector<16x384xf32>
    %3 = tpu.matmul %1, %2, %cst {dimension_numbers = #tpu.dot_dimension_numbers<[1], [0], [0], [1], [0, 0, 1, 1], [], []>} : vector<16x12xf32>, vector<12x384xf32>, vector<16x384xf32> -> vector<16x384xf32>
    %c0_5 = arith.constant 0 : index
    %c0_6 = arith.constant 0 : index
    %4 = vector.load %arg5[%c0_5, %c0_6] : memref<1x384xf32, #tpu.memory_space<vmem>>, vector<1x384xf32>
    %5 = vector.broadcast %4 : vector<1x384xf32> to vector<16x384xf32>
    %6 = arith.mulf %3, %5 : vector<16x384xf32>
    %c0_7 = arith.constant 0 : index
    %c0_8 = arith.constant 0 : index
    %7 = vector.load %arg6[%c0_7, %c0_8] : memref<1x384xf32, #tpu.memory_space<vmem>>, vector<1x384xf32>
    %8 = vector.broadcast %7 : vector<1x384xf32> to vector<16x384xf32>
    %9 = arith.addf %6, %8 : vector<16x384xf32>
    %cst_9 = arith.constant 0.000000e+00 : f32
    %10 = vector.broadcast %cst_9 : f32 to vector<16x384xf32>
    %11 = arith.cmpf oge, %9, %10 : vector<16x384xf32>
    %12 = vector.broadcast %0 : vector<1x1xf32> to vector<16x384xf32>
    %13 = arith.mulf %12, %9 : vector<16x384xf32>
    %14 = arith.select %11, %9, %13 : vector<16x384xi1>, vector<16x384xf32>
    %c0_10 = arith.constant 0 : index
    %c0_11 = arith.constant 0 : index
    %15 = vector.load %arg4[%c0_10, %c0_11] : memref<384x384xf32, #tpu.memory_space<vmem>>, vector<384x384xf32>
    %cst_12 = arith.constant dense<0.000000e+00> : vector<16x384xf32>
    %16 = tpu.matmul %14, %15, %cst_12 {dimension_numbers = #tpu.dot_dimension_numbers<[1], [0], [0], [1], [0, 0, 1, 1], [], []>} : vector<16x384xf32>, vector<384x384xf32>, vector<16x384xf32> -> vector<16x384xf32>
    %cst_13 = arith.constant 1.000000e+00 : f32
    %17 = vector.broadcast %cst_13 : f32 to vector<8x16xf32>
    %cst_14 = arith.constant dense<0.000000e+00> : vector<8x384xf32>
    %18 = tpu.matmul %17, %16, %cst_14 {dimension_numbers = #tpu.dot_dimension_numbers<[1], [0], [0], [1], [0, 0, 1, 1], [], []>} : vector<8x16xf32>, vector<16x384xf32>, vector<8x384xf32> -> vector<8x384xf32>
    %c0_15 = arith.constant 0 : index
    %c0_16 = arith.constant 0 : index
    %c0_17 = arith.constant 0 : index
    %19 = vector.load %arg7[%c0_15, %c0_16, %c0_17] : memref<1x8x768xf32, #tpu.memory_space<vmem>>, vector<1x8x384xf32>
    %20 = vector.shape_cast %19 : vector<1x8x384xf32> to vector<8x384xf32>
    %21 = vector.shape_cast %18 : vector<8x384xf32> to vector<1x8x384xf32>
    tpu.vector_store %arg7[%c0_15, %c0_16, %c0_17], %21 {strides = array<i32>} : memref<1x8x768xf32, #tpu.memory_space<vmem>>, vector<1x8x384xf32>,
    %22 = arith.mulf %16, %16 : vector<16x384xf32>
    %cst_18 = arith.constant dense<0.000000e+00> : vector<8x384xf32>
    %23 = tpu.matmul %17, %22, %cst_18 {dimension_numbers = #tpu.dot_dimension_numbers<[1], [0], [0], [1], [0, 0, 1, 1], [], []>} : vector<8x16xf32>, vector<16x384xf32>, vector<8x384xf32> -> vector<8x384xf32>
    %c0_19 = arith.constant 0 : index
    %c0_20 = arith.constant 0 : index
    %c384 = arith.constant 384 : index
    %24 = vector.load %arg7[%c0_19, %c0_20, %c384] : memref<1x8x768xf32, #tpu.memory_space<vmem>>, vector<1x8x384xf32>
    %25 = vector.shape_cast %24 : vector<1x8x384xf32> to vector<8x384xf32>
    %26 = vector.shape_cast %23 : vector<8x384xf32> to vector<1x8x384xf32>
    tpu.vector_store %arg7[%c0_19, %c0_20, %c384], %26 {strides = array<i32>} : memref<1x8x768xf32, #tpu.memory_space<vmem>>, vector<1x8x384xf32>,
    return
  }
  func.func @transform_0(%arg0: i32) -> (i32, i32) {
    %c0_i32 = arith.constant 0 : i32
    %c0_i32_0 = arith.constant 0 : i32
    %c0_i32_1 = arith.constant 0 : i32
    return %c0_i32, %c0_i32_0 : i32, i32
  }
  func.func @transform_1(%arg0: i32) -> (i32, i32) {
    %c0_i32 = arith.constant 0 : i32
    %c0_i32_0 = arith.constant 0 : i32
    return %arg0, %c0_i32 : i32, i32
  }
  func.func @transform_2(%arg0: i32) -> (i32, i32) {
    %c0_i32 = arith.constant 0 : i32
    %c0_i32_0 = arith.constant 0 : i32
    %c0_i32_1 = arith.constant 0 : i32
    return %c0_i32, %c0_i32_0 : i32, i32
  }
  func.func @transform_3(%arg0: i32) -> (i32, i32) {
    %c0_i32 = arith.constant 0 : i32
    %c0_i32_0 = arith.constant 0 : i32
    %c0_i32_1 = arith.constant 0 : i32
    return %c0_i32, %c0_i32_0 : i32, i32
  }
  func.func @transform_4(%arg0: i32) -> (i32, i32) {
    %c0_i32 = arith.constant 0 : i32
    %c0_i32_0 = arith.constant 0 : i32
    %c0_i32_1 = arith.constant 0 : i32
    return %c0_i32, %c0_i32_0 : i32, i32
  }
  func.func @transform_5(%arg0: i32) -> (i32, i32) {
    %c0_i32 = arith.constant 0 : i32
    %c0_i32_0 = arith.constant 0 : i32
    %c0_i32_1 = arith.constant 0 : i32
    return %c0_i32, %c0_i32_0 : i32, i32
  }
  func.func @transform_6(%arg0: i32) -> (i32, i32, i32) {
    %c0_i32 = arith.constant 0 : i32
    %c0_i32_0 = arith.constant 0 : i32
    %c0_i32_1 = arith.constant 0 : i32
    return %arg0, %c0_i32, %c0_i32_0 : i32, i32, i32
  }
}

module attributes {stable_mosaic.version = 11 : i64} {
  func.func @_apply_kernel(%arg0: i32, %arg1: memref<1x2xf32, #tpu.memory_space<vmem>>, %arg2: memref<16x12xf32, #tpu.memory_space<vmem>>, %arg3: memref<12x384xf32, #tpu.memory_space<vmem>>, %arg4: memref<12x384xf32, #tpu.memory_space<vmem>>, %arg5: memref<384x384xf32, #tpu.memory_space<vmem>>, %arg6: memref<1x384xf32, #tpu.memory_space<vmem>>, %arg7: memref<1x384xf32, #tpu.memory_space<vmem>>, %arg8: memref<1x384xf32, #tpu.memory_space<vmem>>, %arg9: memref<1x384xf32, #tpu.memory_space<vmem>>, %arg10: memref<16x8xf32, #tpu.memory_space<vmem>>) attributes {dimension_semantics = [#tpu.dimension_semantics<parallel>], iteration_bounds = array<i64: 1>, scalar_prefetch = 0 : i64, scratch_operands = 0 : i64, tpu.core_type = #tpu.core_type<tc>, window_params = [{pipeline_mode = #tpu.pipeline_mode<synchronous>, transform_indices = @transform_0, window_bounds = array<i64: 1, 2>}, {transform_indices = @transform_1, window_bounds = array<i64: 16, 12>}, {pipeline_mode = #tpu.pipeline_mode<synchronous>, transform_indices = @transform_2, window_bounds = array<i64: 12, 384>}, {pipeline_mode = #tpu.pipeline_mode<synchronous>, transform_indices = @transform_3, window_bounds = array<i64: 12, 384>}, {pipeline_mode = #tpu.pipeline_mode<synchronous>, transform_indices = @transform_4, window_bounds = array<i64: 384, 384>}, {pipeline_mode = #tpu.pipeline_mode<synchronous>, transform_indices = @transform_5, window_bounds = array<i64: 1, 384>}, {pipeline_mode = #tpu.pipeline_mode<synchronous>, transform_indices = @transform_6, window_bounds = array<i64: 1, 384>}, {pipeline_mode = #tpu.pipeline_mode<synchronous>, transform_indices = @transform_7, window_bounds = array<i64: 1, 384>}, {pipeline_mode = #tpu.pipeline_mode<synchronous>, transform_indices = @transform_8, window_bounds = array<i64: 1, 384>}, {transform_indices = @transform_9, window_bounds = array<i64: 16, 8>}]} {
    %c0 = arith.constant 0 : index
    %c0_0 = arith.constant 0 : index
    %0 = vector.load %arg1[%c0, %c0_0] : memref<1x2xf32, #tpu.memory_space<vmem>>, vector<1x1xf32>
    %c0_1 = arith.constant 0 : index
    %c1 = arith.constant 1 : index
    %1 = vector.load %arg1[%c0_1, %c1] : memref<1x2xf32, #tpu.memory_space<vmem>>, vector<1x1xf32>
    %c0_2 = arith.constant 0 : index
    %c0_3 = arith.constant 0 : index
    %2 = vector.load %arg2[%c0_2, %c0_3] : memref<16x12xf32, #tpu.memory_space<vmem>>, vector<16x12xf32>
    %c0_4 = arith.constant 0 : index
    %c0_5 = arith.constant 0 : index
    %3 = vector.load %arg3[%c0_4, %c0_5] : memref<12x384xf32, #tpu.memory_space<vmem>>, vector<12x384xf32>
    %cst = arith.constant dense<0.000000e+00> : vector<16x384xf32>
    %4 = tpu.matmul %2, %3, %cst {dimension_numbers = #tpu.dot_dimension_numbers<[1], [0], [0], [1], [0, 0, 1, 1], [], []>} : vector<16x12xf32>, vector<12x384xf32>, vector<16x384xf32> -> vector<16x384xf32>
    %c0_6 = arith.constant 0 : index
    %c0_7 = arith.constant 0 : index
    %5 = vector.load %arg6[%c0_6, %c0_7] : memref<1x384xf32, #tpu.memory_space<vmem>>, vector<1x384xf32>
    %6 = vector.broadcast %5 : vector<1x384xf32> to vector<16x384xf32>
    %7 = arith.mulf %4, %6 : vector<16x384xf32>
    %c0_8 = arith.constant 0 : index
    %c0_9 = arith.constant 0 : index
    %8 = vector.load %arg7[%c0_8, %c0_9] : memref<1x384xf32, #tpu.memory_space<vmem>>, vector<1x384xf32>
    %9 = vector.broadcast %8 : vector<1x384xf32> to vector<16x384xf32>
    %10 = arith.addf %7, %9 : vector<16x384xf32>
    %cst_10 = arith.constant 0.000000e+00 : f32
    %11 = vector.broadcast %cst_10 : f32 to vector<16x384xf32>
    %12 = arith.cmpf oge, %10, %11 : vector<16x384xf32>
    %13 = vector.broadcast %0 : vector<1x1xf32> to vector<16x384xf32>
    %14 = arith.mulf %13, %10 : vector<16x384xf32>
    %15 = arith.select %12, %10, %14 : vector<16x384xi1>, vector<16x384xf32>
    %c0_11 = arith.constant 0 : index
    %c0_12 = arith.constant 0 : index
    %16 = vector.load %arg5[%c0_11, %c0_12] : memref<384x384xf32, #tpu.memory_space<vmem>>, vector<384x384xf32>
    %cst_13 = arith.constant dense<0.000000e+00> : vector<16x384xf32>
    %17 = tpu.matmul %15, %16, %cst_13 {dimension_numbers = #tpu.dot_dimension_numbers<[1], [0], [0], [1], [0, 0, 1, 1], [], []>} : vector<16x384xf32>, vector<384x384xf32>, vector<16x384xf32> -> vector<16x384xf32>
    %c0_14 = arith.constant 0 : index
    %c0_15 = arith.constant 0 : index
    %18 = vector.load %arg4[%c0_14, %c0_15] : memref<12x384xf32, #tpu.memory_space<vmem>>, vector<12x384xf32>
    %cst_16 = arith.constant dense<0.000000e+00> : vector<16x384xf32>
    %19 = tpu.matmul %2, %18, %cst_16 {dimension_numbers = #tpu.dot_dimension_numbers<[1], [0], [0], [1], [0, 0, 1, 1], [], []>} : vector<16x12xf32>, vector<12x384xf32>, vector<16x384xf32> -> vector<16x384xf32>
    %c0_17 = arith.constant 0 : index
    %c0_18 = arith.constant 0 : index
    %20 = vector.load %arg8[%c0_17, %c0_18] : memref<1x384xf32, #tpu.memory_space<vmem>>, vector<1x384xf32>
    %21 = vector.broadcast %20 : vector<1x384xf32> to vector<16x384xf32>
    %22 = arith.mulf %17, %21 : vector<16x384xf32>
    %c0_19 = arith.constant 0 : index
    %c0_20 = arith.constant 0 : index
    %23 = vector.load %arg9[%c0_19, %c0_20] : memref<1x384xf32, #tpu.memory_space<vmem>>, vector<1x384xf32>
    %24 = vector.broadcast %23 : vector<1x384xf32> to vector<16x384xf32>
    %25 = arith.addf %22, %24 : vector<16x384xf32>
    %26 = arith.addf %25, %19 : vector<16x384xf32>
    %cst_21 = arith.constant 0.000000e+00 : f32
    %27 = vector.broadcast %cst_21 : f32 to vector<16x384xf32>
    %28 = arith.cmpf oge, %26, %27 : vector<16x384xf32>
    %29 = vector.broadcast %1 : vector<1x1xf32> to vector<16x384xf32>
    %30 = arith.mulf %29, %26 : vector<16x384xf32>
    %31 = arith.select %28, %26, %30 : vector<16x384xi1>, vector<16x384xf32>
    %32 = vector.extract_strided_slice %31 {offsets = [0, 0], sizes = [16, 128], strides = [1, 1]} : vector<16x384xf32> to vector<16x128xf32>
    %33 = vector.extract_strided_slice %31 {offsets = [0, 128], sizes = [16, 128], strides = [1, 1]} : vector<16x384xf32> to vector<16x128xf32>
    %34 = arith.maximumf %32, %33 : vector<16x128xf32>
    %35 = vector.extract_strided_slice %31 {offsets = [0, 256], sizes = [16, 128], strides = [1, 1]} : vector<16x384xf32> to vector<16x128xf32>
    %36 = arith.maximumf %34, %35 : vector<16x128xf32>
    %37 = vector.extract_strided_slice %36 {offsets = [0, 0], sizes = [16, 8], strides = [1, 1]} : vector<16x128xf32> to vector<16x8xf32>
    %c0_22 = arith.constant 0 : index
    %c0_23 = arith.constant 0 : index
    %38 = vector.load %arg10[%c0_22, %c0_23] : memref<16x8xf32, #tpu.memory_space<vmem>>, vector<16x8xf32>
    tpu.vector_store %arg10[%c0_22, %c0_23], %37 {strides = array<i32>} : memref<16x8xf32, #tpu.memory_space<vmem>>, vector<16x8xf32>,
    return
  }
  func.func @transform_0(%arg0: i32) -> (i32, i32) {
    %c0_i32 = arith.constant 0 : i32
    %c0_i32_0 = arith.constant 0 : i32
    %c0_i32_1 = arith.constant 0 : i32
    return %c0_i32, %c0_i32_0 : i32, i32
  }
  func.func @transform_1(%arg0: i32) -> (i32, i32) {
    %c0_i32 = arith.constant 0 : i32
    %c0_i32_0 = arith.constant 0 : i32
    return %arg0, %c0_i32 : i32, i32
  }
  func.func @transform_2(%arg0: i32) -> (i32, i32) {
    %c0_i32 = arith.constant 0 : i32
    %c0_i32_0 = arith.constant 0 : i32
    %c0_i32_1 = arith.constant 0 : i32
    return %c0_i32, %c0_i32_0 : i32, i32
  }
  func.func @transform_3(%arg0: i32) -> (i32, i32) {
    %c0_i32 = arith.constant 0 : i32
    %c0_i32_0 = arith.constant 0 : i32
    %c0_i32_1 = arith.constant 0 : i32
    return %c0_i32, %c0_i32_0 : i32, i32
  }
  func.func @transform_4(%arg0: i32) -> (i32, i32) {
    %c0_i32 = arith.constant 0 : i32
    %c0_i32_0 = arith.constant 0 : i32
    %c0_i32_1 = arith.constant 0 : i32
    return %c0_i32, %c0_i32_0 : i32, i32
  }
  func.func @transform_5(%arg0: i32) -> (i32, i32) {
    %c0_i32 = arith.constant 0 : i32
    %c0_i32_0 = arith.constant 0 : i32
    %c0_i32_1 = arith.constant 0 : i32
    return %c0_i32, %c0_i32_0 : i32, i32
  }
  func.func @transform_6(%arg0: i32) -> (i32, i32) {
    %c0_i32 = arith.constant 0 : i32
    %c0_i32_0 = arith.constant 0 : i32
    %c0_i32_1 = arith.constant 0 : i32
    return %c0_i32, %c0_i32_0 : i32, i32
  }
  func.func @transform_7(%arg0: i32) -> (i32, i32) {
    %c0_i32 = arith.constant 0 : i32
    %c0_i32_0 = arith.constant 0 : i32
    %c0_i32_1 = arith.constant 0 : i32
    return %c0_i32, %c0_i32_0 : i32, i32
  }
  func.func @transform_8(%arg0: i32) -> (i32, i32) {
    %c0_i32 = arith.constant 0 : i32
    %c0_i32_0 = arith.constant 0 : i32
    %c0_i32_1 = arith.constant 0 : i32
    return %c0_i32, %c0_i32_0 : i32, i32
  }
  func.func @transform_9(%arg0: i32) -> (i32, i32) {
    %c0_i32 = arith.constant 0 : i32
    %c0_i32_0 = arith.constant 0 : i32
    return %arg0, %c0_i32 : i32, i32
  }
}

</mosaic_0001>

<llo_original>
// kernel: resblock_forward_nlc.3
$region0: #{resblock_forward_nlc.3}
  #allocation0 [shape = 'u32[]', space=smem, size = 0x4, offset = 0x4, fixed_abs, tag = 'smem constant byte address 0x4 - core index']
  #allocation1 [shape = 'u32[144,128]{1,0:T(1,128)}', space=vmem, size = 0x12000, scoped, tag = 'internal scratch']
  %s0 = inlined_call_operand.vmem [shape: f32[16,12], index: 0, kind: input, shape index: {}]
  %s1 = inlined_call_operand.vmem [shape: f32[12,384], index: 1, kind: input, shape index: {}]
  %s2 = inlined_call_operand.vmem [shape: f32[1,8,768], index: 2, kind: output, shape index: {}]
  %s3 = sld [smem:[#allocation0]]
  $region18: #{resblock_forward_nlc.3} parent=0
    _
  %s5 = ssub.s32 1, %s3
  %s6 = scalar_select 0, %s5, %s3
  // Predicated region
  $region2: #{resblock_forward_nlc.3} parent=0 // pred_check
    _
  $region3: #{resblock_forward_nlc.3} parent=0 // pred_check_branch
    %8 = sbr.rel (0) target = $region5
  $region4: #{resblock_forward_nlc.3} parent=0 // pred_region
    _
  $region5: #{resblock_forward_nlc.3} parent=0 // pred_fallthru
    _
  // Predicated region
  $region6: #{resblock_forward_nlc.3} parent=0 // pred_check
    _
  $region7: #{resblock_forward_nlc.3} parent=0 // pred_check_branch
    %10 = sbr.rel (0) target = $region9
  $region8: #{resblock_forward_nlc.3} parent=0 // pred_region
    _
  $region9: #{resblock_forward_nlc.3} parent=0 // pred_fallthru
    _
  %v11 = vld [vmem:[%s0] sm:$0xff]
  %v12 = vld [vmem:[%s0 + $0x8] sm:$0xff]
  %v13 = vld [vmem:[%s1] sm:$0xff]
  %v14 = vld [vmem:[%s1 + $0x8] sm:$0xff]
  %v15 = vld [vmem:[%s1 + $0x10] sm:$0xff]
  %v16 = vld [vmem:[%s1 + $0x18] sm:$0xf]
  %v17 = vld [vmem:[%s1 + $0x20] sm:$0xf]
  %v18 = vld [vmem:[%s1 + $0x28] sm:$0xf]
  %vm19 = vcmask 97280
  %v21 = vsel %vm19, %v11, 0
  %v24 = vsel %vm19, %v12, 0
  %vm26 = vcmask 1043456
  %v28 = vsel %vm26, %v16, 0
  %v31 = vsel %vm26, %v17, 0
  %v34 = vsel %vm26, %v18, 0
  %36 = vmatprep.subr.mxu0 %v14
  %37 = vmatpush1.msra.mxu0 %v13
  %38 = vmatprep.subr.mxu0 %v31
  %39 = vmatpush1.msra.mxu0 %v28
  %40 = vmatprep.subr.mxu0 0.0
  %41 = vmatpush1.msra.mxu0 0.0
  %42 = vmatprep.subr.mxu0 0.0
  %43 = vmatpush1.msra.mxu0 0.0
  %44 = vmatprep.subr.mxu0 0.0
  %45 = vmatpush1.msra.mxu0 0.0
  %46 = vmatprep.subr.mxu0 0.0
  %47 = vmatpush1.msra.mxu0 0.0
  %48 = vmatprep.subr.mxu0 0.0
  %49 = vmatpush1.msra.mxu0 0.0
  %50 = vmatprep.subr.mxu0 0.0
  %51 = vmatpush1.msra.mxu0 0.0
  %52 = vmatprep.subr.mxu0 0.0
  %53 = vmatpush1.msra.mxu0 0.0
  %54 = vmatprep.subr.mxu0 0.0
  %55 = vmatpush1.msra.mxu0 0.0
  %56 = vmatprep.subr.mxu0 0.0
  %57 = vmatpush1.msra.mxu0 0.0
  %58 = vmatprep.subr.mxu0 0.0
  %59 = vmatpush1.msra.mxu0 0.0
  %60 = vmatprep.subr.mxu0 0.0
  %61 = vmatpush1.msra.mxu0 0.0
  %62 = vmatprep.subr.mxu0 0.0
  %63 = vmatpush1.msra.mxu0 0.0
  %64 = vmatprep.subr.mxu0 0.0
  %65 = vmatpush1.msra.mxu0 0.0
  %66 = vmatprep.subr.mxu0 0.0
  %67 = vmatpush1.msra.mxu0 0.0
  %68 = vmatprep.subr.mxu0 0.0
  %69 = vmatpush1.msra.mxu0 0.0
  %70 = vmatprep.subr.mxu0 0.0
  %71 = vmatpush1.msra.mxu0 0.0
  %72 = vmatprep.subr.mxu0 0.0
  %73 = vmatpush1.msra.mxu0 0.0
  %74 = vmatprep.subr.mxu0 0.0
  %75 = vmatpush1.msra.mxu0 0.0
  %76 = vmatprep.subr.mxu0 0.0
  %77 = vmatpush1.msra.mxu0 0.0
  %78 = vmatprep.subr.mxu0 0.0
  %79 = vmatpush1.msra.mxu0 0.0
  %80 = vmatprep.subr.mxu0 0.0
  %81 = vmatpush1.msra.mxu0 0.0
  %82 = vmatprep.subr.mxu0 0.0
  %83 = vmatpush1.msra.mxu0 0.0
  %84 = vmatprep.subr.mxu0 0.0
  %85 = vmatpush1.msra.mxu0 0.0
  %86 = vmatprep.subr.mxu0 0.0
  %87 = vmatpush1.msra.mxu0 0.0
  %88 = vmatprep.subr.mxu0 0.0
  %89 = vmatpush1.msra.mxu0 0.0
  %90 = vmatprep.subr.mxu0 0.0
  %91 = vmatpush1.msra.mxu0 0.0
  %92 = vmatprep.subr.mxu0 0.0
  %93 = vmatpush1.msra.mxu0 0.0
  %94 = vmatprep.subr.mxu0 0.0
  %95 = vmatpush1.msra.mxu0 0.0
  %96 = vmatprep.subr.mxu0 0.0
  %97 = vmatpush1.msra.mxu0 0.0
  %98 = vmatprep.subr.mxu0 0.0
  %99 = vmatpush1.msra.mxu0 0.0
  %100 = vmatprep.mubr.f32.mxu0 0.0
  %101 = vmatmul.mubr.f32.gmra.mrb[0].mxu0 %v21
  %v102 = vpop.f32.mrb[0].mxu0
  %v103 = vadd.f32 0.0, %v102
  %v104 = vpop.f32.mrb[0].mxu0
  %v105 = vadd.f32 0.0, %v104
  %106 = vmatprep.mubr.f32.mxu0 0.0
  %107 = vmatmul.mubr.f32.gmra.mrb[0].mxu0 %v24
  %v108 = vpop.f32.mrb[0].mxu0
  %v109 = vadd.f32 0.0, %v108
  %v110 = vpop.f32.mrb[0].mxu0
  %v111 = vadd.f32 0.0, %v110
  %112 = vdwg.mxu0
  %113 = vmatprep.subr.mxu0 0.0
  %114 = vmatpush1.msra.mxu0 %v15
  %115 = vmatprep.subr.mxu0 0.0
  %116 = vmatpush1.msra.mxu0 %v34
  %117 = vmatprep.subr.mxu0 0.0
  %118 = vmatpush1.msra.mxu0 0.0
  %119 = vmatprep.subr.mxu0 0.0
  %120 = vmatpush1.msra.mxu0 0.0
  %121 = vmatprep.subr.mxu0 0.0
  %122 = vmatpush1.msra.mxu0 0.0
  %123 = vmatprep.subr.mxu0 0.0
  %124 = vmatpush1.msra.mxu0 0.0
  %125 = vmatprep.subr.mxu0 0.0
  %126 = vmatpush1.msra.mxu0 0.0
  %127 = vmatprep.subr.mxu0 0.0
  %128 = vmatpush1.msra.mxu0 0.0
  %129 = vmatprep.subr.mxu0 0.0
  %130 = vmatpush1.msra.mxu0 0.0
  %131 = vmatprep.subr.mxu0 0.0
  %132 = vmatpush1.msra.mxu0 0.0
  %133 = vmatprep.subr.mxu0 0.0
  %134 = vmatpush1.msra.mxu0 0.0
  %135 = vmatprep.subr.mxu0 0.0
  %136 = vmatpush1.msra.mxu0 0.0
  %137 = vmatprep.subr.mxu0 0.0
  %138 = vmatpush1.msra.mxu0 0.0
  %139 = vmatprep.subr.mxu0 0.0
  %140 = vmatpush1.msra.mxu0 0.0
  %141 = vmatprep.subr.mxu0 0.0
  %142 = vmatpush1.msra.mxu0 0.0
  %143 = vmatprep.subr.mxu0 0.0
  %144 = vmatpush1.msra.mxu0 0.0
  %145 = vmatprep.subr.mxu0 0.0
  %146 = vmatpush1.msra.mxu0 0.0
  %147 = vmatprep.subr.mxu0 0.0
  %148 = vmatpush1.msra.mxu0 0.0
  %149 = vmatprep.subr.mxu0 0.0
  %150 = vmatpush1.msra.mxu0 0.0
  %151 = vmatprep.subr.mxu0 0.0
  %152 = vmatpush1.msra.mxu0 0.0
  %153 = vmatprep.subr.mxu0 0.0
  %154 = vmatpush1.msra.mxu0 0.0
  %155 = vmatprep.subr.mxu0 0.0
  %156 = vmatpush1.msra.mxu0 0.0
  %157 = vmatprep.subr.mxu0 0.0
  %158 = vmatpush1.msra.mxu0 0.0
  %159 = vmatprep.subr.mxu0 0.0
  %160 = vmatpush1.msra.mxu0 0.0
  %161 = vmatprep.subr.mxu0 0.0
  %162 = vmatpush1.msra.mxu0 0.0
  %163 = vmatprep.subr.mxu0 0.0
  %164 = vmatpush1.msra.mxu0 0.0
  %165 = vmatprep.subr.mxu0 0.0
  %166 = vmatpush1.msra.mxu0 0.0
  %167 = vmatprep.subr.mxu0 0.0
  %168 = vmatpush1.msra.mxu0 0.0
  %169 = vmatprep.subr.mxu0 0.0
  %170 = vmatpush1.msra.mxu0 0.0
  %171 = vmatprep.subr.mxu0 0.0
  %172 = vmatpush1.msra.mxu0 0.0
  %173 = vmatprep.subr.mxu0 0.0
  %174 = vmatpush1.msra.mxu0 0.0
  %175 = vmatprep.subr.mxu0 0.0
  %176 = vmatpush1.msra.mxu0 0.0
  %177 = vmatprep.mubr.f32.mxu0 0.0
  %178 = vmatmul.mubr.f32.gmra.mrb[0].mxu0 %v21
  %v179 = vpop.f32.mrb[0].mxu0
  %v180 = vadd.f32 0.0, %v179
  %v181 = vpop.f32.mrb[0].mxu0
  %182 = vmatprep.mubr.f32.mxu0 0.0
  %183 = vmatmul.mubr.f32.gmra.mrb[0].mxu0 %v24
  %v184 = vpop.f32.mrb[0].mxu0
  %v185 = vadd.f32 0.0, %v184
  %v186 = vpop.f32.mrb[0].mxu0
  %187 = vdwg.mxu0
  %vm188 = vcmask 130048
  %v190 = vsel %vm188, 1.0, 0
  %192 = vmatprep.subr.mxu0 %v105
  %193 = vmatpush1.msra.mxu0 %v103
  %194 = vmatprep.subr.mxu0 %v111
  %195 = vmatpush1.msra.mxu0 %v109
  %196 = vmatprep.subr.mxu0 0.0
  %197 = vmatpush1.msra.mxu0 0.0
  %198 = vmatprep.subr.mxu0 0.0
  %199 = vmatpush1.msra.mxu0 0.0
  %200 = vmatprep.subr.mxu0 0.0
  %201 = vmatpush1.msra.mxu0 0.0
  %202 = vmatprep.subr.mxu0 0.0
  %203 = vmatpush1.msra.mxu0 0.0
  %204 = vmatprep.subr.mxu0 0.0
  %205 = vmatpush1.msra.mxu0 0.0
  %206 = vmatprep.subr.mxu0 0.0
  %207 = vmatpush1.msra.mxu0 0.0
  %208 = vmatprep.subr.mxu0 0.0
  %209 = vmatpush1.msra.mxu0 0.0
  %210 = vmatprep.subr.mxu0 0.0
  %211 = vmatpush1.msra.mxu0 0.0
  %212 = vmatprep.subr.mxu0 0.0
  %213 = vmatpush1.msra.mxu0 0.0
  %214 = vmatprep.subr.mxu0 0.0
  %215 = vmatpush1.msra.mxu0 0.0
  %216 = vmatprep.subr.mxu0 0.0
  %217 = vmatpush1.msra.mxu0 0.0
  %218 = vmatprep.subr.mxu0 0.0
  %219 = vmatpush1.msra.mxu0 0.0
  %220 = vmatprep.subr.mxu0 0.0
  %221 = vmatpush1.msra.mxu0 0.0
  %222 = vmatprep.subr.mxu0 0.0
  %223 = vmatpush1.msra.mxu0 0.0
  %224 = vmatprep.subr.mxu0 0.0
  %225 = vmatpush1.msra.mxu0 0.0
  %226 = vmatprep.subr.mxu0 0.0
  %227 = vmatpush1.msra.mxu0 0.0
  %228 = vmatprep.subr.mxu0 0.0
  %229 = vmatpush1.msra.mxu0 0.0
  %230 = vmatprep.subr.mxu0 0.0
  %231 = vmatpush1.msra.mxu0 0.0
  %232 = vmatprep.subr.mxu0 0.0
  %233 = vmatpush1.msra.mxu0 0.0
  %234 = vmatprep.subr.mxu0 0.0
  %235 = vmatpush1.msra.mxu0 0.0
  %236 = vmatprep.subr.mxu0 0.0
  %237 = vmatpush1.msra.mxu0 0.0
  %238 = vmatprep.subr.mxu0 0.0
  %239 = vmatpush1.msra.mxu0 0.0
  %240 = vmatprep.subr.mxu0 0.0
  %241 = vmatpush1.msra.mxu0 0.0
  %242 = vmatprep.subr.mxu0 0.0
  %243 = vmatpush1.msra.mxu0 0.0
  %244 = vmatprep.subr.mxu0 0.0
  %245 = vmatpush1.msra.mxu0 0.0
  %246 = vmatprep.subr.mxu0 0.0
  %247 = vmatpush1.msra.mxu0 0.0
  %248 = vmatprep.subr.mxu0 0.0
  %249 = vmatpush1.msra.mxu0 0.0
  %250 = vmatprep.subr.mxu0 0.0
  %251 = vmatpush1.msra.mxu0 0.0
  %252 = vmatprep.subr.mxu0 0.0
  %253 = vmatpush1.msra.mxu0 0.0
  %254 = vmatprep.subr.mxu0 0.0
  %255 = vmatpush1.msra.mxu0 0.0
  %256 = vmatprep.mubr.f32.mxu0 0.0
  %257 = vmatmul.mubr.f32.gmra.mrb[0].mxu0 %v190
  %v258 = vpop.f32.mrb[0].mxu0
  %v259 = vadd.f32 0.0, %v258
  %v260 = vpop.f32.mrb[0].mxu0
  %v261 = vadd.f32 0.0, %v260
  %262 = vdwg.mxu0
  %263 = vmatprep.subr.mxu0 0.0
  %264 = vmatpush1.msra.mxu0 %v180
  %265 = vmatprep.subr.mxu0 0.0
  %266 = vmatpush1.msra.mxu0 %v185
  %267 = vmatprep.subr.mxu0 0.0
  %268 = vmatpush1.msra.mxu0 0.0
  %269 = vmatprep.subr.mxu0 0.0
  %270 = vmatpush1.msra.mxu0 0.0
  %271 = vmatprep.subr.mxu0 0.0
  %272 = vmatpush1.msra.mxu0 0.0
  %273 = vmatprep.subr.mxu0 0.0
  %274 = vmatpush1.msra.mxu0 0.0
  %275 = vmatprep.subr.mxu0 0.0
  %276 = vmatpush1.msra.mxu0 0.0
  %277 = vmatprep.subr.mxu0 0.0
  %278 = vmatpush1.msra.mxu0 0.0
  %279 = vmatprep.subr.mxu0 0.0
  %280 = vmatpush1.msra.mxu0 0.0
  %281 = vmatprep.subr.mxu0 0.0
  %282 = vmatpush1.msra.mxu0 0.0
  %283 = vmatprep.subr.mxu0 0.0
  %284 = vmatpush1.msra.mxu0 0.0
  %285 = vmatprep.subr.mxu0 0.0
  %286 = vmatpush1.msra.mxu0 0.0
  %287 = vmatprep.subr.mxu0 0.0
  %288 = vmatpush1.msra.mxu0 0.0
  %289 = vmatprep.subr.mxu0 0.0
  %290 = vmatpush1.msra.mxu0 0.0
  %291 = vmatprep.subr.mxu0 0.0
  %292 = vmatpush1.msra.mxu0 0.0
  %293 = vmatprep.subr.mxu0 0.0
  %294 = vmatpush1.msra.mxu0 0.0
  %295 = vmatprep.subr.mxu0 0.0
  %296 = vmatpush1.msra.mxu0 0.0
  %297 = vmatprep.subr.mxu0 0.0
  %298 = vmatpush1.msra.mxu0 0.0
  %299 = vmatprep.subr.mxu0 0.0
  %300 = vmatpush1.msra.mxu0 0.0
  %301 = vmatprep.subr.mxu0 0.0
  %302 = vmatpush1.msra.mxu0 0.0
  %303 = vmatprep.subr.mxu0 0.0
  %304 = vmatpush1.msra.mxu0 0.0
  %305 = vmatprep.subr.mxu0 0.0
  %306 = vmatpush1.msra.mxu0 0.0
  %307 = vmatprep.subr.mxu0 0.0
  %308 = vmatpush1.msra.mxu0 0.0
  %309 = vmatprep.subr.mxu0 0.0
  %310 = vmatpush1.msra.mxu0 0.0
  %311 = vmatprep.subr.mxu0 0.0
  %312 = vmatpush1.msra.mxu0 0.0
  %313 = vmatprep.subr.mxu0 0.0
  %314 = vmatpush1.msra.mxu0 0.0
  %315 = vmatprep.subr.mxu0 0.0
  %316 = vmatpush1.msra.mxu0 0.0
  %317 = vmatprep.subr.mxu0 0.0
  %318 = vmatpush1.msra.mxu0 0.0
  %319 = vmatprep.subr.mxu0 0.0
  %320 = vmatpush1.msra.mxu0 0.0
  %321 = vmatprep.subr.mxu0 0.0
  %322 = vmatpush1.msra.mxu0 0.0
  %323 = vmatprep.subr.mxu0 0.0
  %324 = vmatpush1.msra.mxu0 0.0
  %325 = vmatprep.subr.mxu0 0.0
  %326 = vmatpush1.msra.mxu0 0.0
  %327 = vmatprep.mubr.f32.mxu0 0.0
  %328 = vmatmul.mubr.f32.gmra.mrb[0].mxu0 %v190
  %v329 = vpop.f32.mrb[0].mxu0
  %v330 = vadd.f32 0.0, %v329
  %v331 = vpop.f32.mrb[0].mxu0
  %332 = vdwg.mxu0
  %333 = vst [vmem:[%s2] sm:$0xff] %v259
  %334 = vst [vmem:[%s2 + $0x8] sm:$0xff] %v261
  %335 = vst [vmem:[%s2 + $0x10] sm:$0xff] %v330
  %v336 = vmul.f32 %v103, %v103
  %v337 = vmul.f32 %v105, %v105
  %v338 = vmul.f32 %v180, %v180
  %v339 = vmul.f32 %v109, %v109
  %v340 = vmul.f32 %v111, %v111
  %v341 = vmul.f32 %v185, %v185
  %342 = vmatprep.subr.mxu0 %v337
  %343 = vmatpush1.msra.mxu0 %v336
  %344 = vmatprep.subr.mxu0 %v340
  %345 = vmatpush1.msra.mxu0 %v339
  %346 = vmatprep.subr.mxu0 0.0
  %347 = vmatpush1.msra.mxu0 0.0
  %348 = vmatprep.subr.mxu0 0.0
  %349 = vmatpush1.msra.mxu0 0.0
  %350 = vmatprep.subr.mxu0 0.0
  %351 = vmatpush1.msra.mxu0 0.0
  %352 = vmatprep.subr.mxu0 0.0
  %353 = vmatpush1.msra.mxu0 0.0
  %354 = vmatprep.subr.mxu0 0.0
  %355 = vmatpush1.msra.mxu0 0.0
  %356 = vmatprep.subr.mxu0 0.0
  %357 = vmatpush1.msra.mxu0 0.0
  %358 = vmatprep.subr.mxu0 0.0
  %359 = vmatpush1.msra.mxu0 0.0
  %360 = vmatprep.subr.mxu0 0.0
  %361 = vmatpush1.msra.mxu0 0.0
  %362 = vmatprep.subr.mxu0 0.0
  %363 = vmatpush1.msra.mxu0 0.0
  %364 = vmatprep.subr.mxu0 0.0
  %365 = vmatpush1.msra.mxu0 0.0
  %366 = vmatprep.subr.mxu0 0.0
  %367 = vmatpush1.msra.mxu0 0.0
  %368 = vmatprep.subr.mxu0 0.0
  %369 = vmatpush1.msra.mxu0 0.0
  %370 = vmatprep.subr.mxu0 0.0
  %371 = vmatpush1.msra.mxu0 0.0
  %372 = vmatprep.subr.mxu0 0.0
  %373 = vmatpush1.msra.mxu0 0.0
  %374 = vmatprep.subr.mxu0 0.0
  %375 = vmatpush1.msra.mxu0 0.0
  %376 = vmatprep.subr.mxu0 0.0
  %377 = vmatpush1.msra.mxu0 0.0
  %378 = vmatprep.subr.mxu0 0.0
  %379 = vmatpush1.msra.mxu0 0.0
  %380 = vmatprep.subr.mxu0 0.0
  %381 = vmatpush1.msra.mxu0 0.0
  %382 = vmatprep.subr.mxu0 0.0
  %383 = vmatpush1.msra.mxu0 0.0
  %384 = vmatprep.subr.mxu0 0.0
  %385 = vmatpush1.msra.mxu0 0.0
  %386 = vmatprep.subr.mxu0 0.0
  %387 = vmatpush1.msra.mxu0 0.0
  %388 = vmatprep.subr.mxu0 0.0
  %389 = vmatpush1.msra.mxu0 0.0
  %390 = vmatprep.subr.mxu0 0.0
  %391 = vmatpush1.msra.mxu0 0.0
  %392 = vmatprep.subr.mxu0 0.0
  %393 = vmatpush1.msra.mxu0 0.0
  %394 = vmatprep.subr.mxu0 0.0
  %395 = vmatpush1.msra.mxu0 0.0
  %396 = vmatprep.subr.mxu0 0.0
  %397 = vmatpush1.msra.mxu0 0.0
  %398 = vmatprep.subr.mxu0 0.0
  %399 = vmatpush1.msra.mxu0 0.0
  %400 = vmatprep.subr.mxu0 0.0
  %401 = vmatpush1.msra.mxu0 0.0
  %402 = vmatprep.subr.mxu0 0.0
  %403 = vmatpush1.msra.mxu0 0.0
  %404 = vmatprep.subr.mxu0 0.0
  %405 = vmatpush1.msra.mxu0 0.0
  %406 = vmatprep.mubr.f32.mxu0 0.0
  %407 = vmatmul.mubr.f32.gmra.mrb[0].mxu0 %v190
  %v408 = vpop.f32.mrb[0].mxu0
  %v409 = vadd.f32 0.0, %v408
  %v410 = vpop.f32.mrb[0].mxu0
  %v411 = vadd.f32 0.0, %v410
  %412 = vdwg.mxu0
  %413 = vmatprep.subr.mxu0 0.0
  %414 = vmatpush1.msra.mxu0 %v338
  %415 = vmatprep.subr.mxu0 0.0
  %416 = vmatpush1.msra.mxu0 %v341
  %417 = vmatprep.subr.mxu0 0.0
  %418 = vmatpush1.msra.mxu0 0.0
  %419 = vmatprep.subr.mxu0 0.0
  %420 = vmatpush1.msra.mxu0 0.0
  %421 = vmatprep.subr.mxu0 0.0
  %422 = vmatpush1.msra.mxu0 0.0
  %423 = vmatprep.subr.mxu0 0.0
  %424 = vmatpush1.msra.mxu0 0.0
  %425 = vmatprep.subr.mxu0 0.0
  %426 = vmatpush1.msra.mxu0 0.0
  %427 = vmatprep.subr.mxu0 0.0
  %428 = vmatpush1.msra.mxu0 0.0
  %429 = vmatprep.subr.mxu0 0.0
  %430 = vmatpush1.msra.mxu0 0.0
  %431 = vmatprep.subr.mxu0 0.0
  %432 = vmatpush1.msra.mxu0 0.0
  %433 = vmatprep.subr.mxu0 0.0
  %434 = vmatpush1.msra.mxu0 0.0
  %435 = vmatprep.subr.mxu0 0.0
  %436 = vmatpush1.msra.mxu0 0.0
  %437 = vmatprep.subr.mxu0 0.0
  %438 = vmatpush1.msra.mxu0 0.0
  %439 = vmatprep.subr.mxu0 0.0
  %440 = vmatpush1.msra.mxu0 0.0
  %441 = vmatprep.subr.mxu0 0.0
  %442 = vmatpush1.msra.mxu0 0.0
  %443 = vmatprep.subr.mxu0 0.0
  %444 = vmatpush1.msra.mxu0 0.0
  %445 = vmatprep.subr.mxu0 0.0
  %446 = vmatpush1.msra.mxu0 0.0
  %447 = vmatprep.subr.mxu0 0.0
  %448 = vmatpush1.msra.mxu0 0.0
  %449 = vmatprep.subr.mxu0 0.0
  %450 = vmatpush1.msra.mxu0 0.0
  %451 = vmatprep.subr.mxu0 0.0
  %452 = vmatpush1.msra.mxu0 0.0
  %453 = vmatprep.subr.mxu0 0.0
  %454 = vmatpush1.msra.mxu0 0.0
  %455 = vmatprep.subr.mxu0 0.0
  %456 = vmatpush1.msra.mxu0 0.0
  %457 = vmatprep.subr.mxu0 0.0
  %458 = vmatpush1.msra.mxu0 0.0
  %459 = vmatprep.subr.mxu0 0.0
  %460 = vmatpush1.msra.mxu0 0.0
  %461 = vmatprep.subr.mxu0 0.0
  %462 = vmatpush1.msra.mxu0 0.0
  %463 = vmatprep.subr.mxu0 0.0
  %464 = vmatpush1.msra.mxu0 0.0
  %465 = vmatprep.subr.mxu0 0.0
  %466 = vmatpush1.msra.mxu0 0.0
  %467 = vmatprep.subr.mxu0 0.0
  %468 = vmatpush1.msra.mxu0 0.0
  %469 = vmatprep.subr.mxu0 0.0
  %470 = vmatpush1.msra.mxu0 0.0
  %471 = vmatprep.subr.mxu0 0.0
  %472 = vmatpush1.msra.mxu0 0.0
  %473 = vmatprep.subr.mxu0 0.0
  %474 = vmatpush1.msra.mxu0 0.0
  %475 = vmatprep.subr.mxu0 0.0
  %476 = vmatpush1.msra.mxu0 0.0
  %477 = vmatprep.mubr.f32.mxu0 0.0
  %478 = vmatmul.mubr.f32.gmra.mrb[0].mxu0 %v190
  %v479 = vpop.f32.mrb[0].mxu0
  %v480 = vadd.f32 0.0, %v479
  %v481 = vpop.f32.mrb[0].mxu0
  %482 = vdwg.mxu0
  %483 = vst [vmem:[%s2 + $0x18] sm:$0xff] %v409
  %484 = vst [vmem:[%s2 + $0x20] sm:$0xff] %v411
  %485 = vst [vmem:[%s2 + $0x28] sm:$0xff] %v480
  // Predicated region
  $region10: #{resblock_forward_nlc.3} parent=0 // pred_check
    _
  $region11: #{resblock_forward_nlc.3} parent=0 // pred_check_branch
    %487 = sbr.rel (0) target = $region13
  $region12: #{resblock_forward_nlc.3} parent=0 // pred_region
    _
  $region13: #{resblock_forward_nlc.3} parent=0 // pred_fallthru
    _
  // Predicated region
  $region14: #{resblock_forward_nlc.3} parent=0 // pred_check
    _
  $region15: #{resblock_forward_nlc.3} parent=0 // pred_check_branch
    %489 = sbr.rel (0) target = $region17
  $region16: #{resblock_forward_nlc.3} parent=0 // pred_region
    _
  $region17: #{resblock_forward_nlc.3} parent=0 // pred_fallthru
    _

// kernel: resblock_forward_nlc.4
$region0: #{resblock_forward_nlc.4}
  #allocation0 [shape = 'u32[]', space=smem, size = 0x4, offset = 0x4, fixed_abs, tag = 'smem constant byte address 0x4 - core index']
  #allocation1 [shape = 'u32[144,128]{1,0:T(1,128)}', space=vmem, size = 0x12000, scoped, tag = 'internal scratch']
  %s0 = inlined_call_operand.vmem [shape: f32[1,2], index: 0, kind: input, shape index: {}]
  %s1 = inlined_call_operand.vmem [shape: f32[16,12], index: 1, kind: input, shape index: {}]
  %s2 = inlined_call_operand.vmem [shape: f32[12,384], index: 2, kind: input, shape index: {}]
  %s3 = inlined_call_operand.vmem [shape: f32[384,384], index: 3, kind: input, shape index: {}]
  %s4 = inlined_call_operand.vmem [shape: f32[1,384], index: 4, kind: input, shape index: {}]
  %s5 = inlined_call_operand.vmem [shape: f32[1,384], index: 5, kind: input, shape index: {}]
  %s6 = inlined_call_operand.vmem [shape: f32[1,8,768], index: 6, kind: output, shape index: {}]
  %s7 = sld [smem:[#allocation0]]
  $region34: #{resblock_forward_nlc.4} parent=0
    _
  %s9 = ssub.s32 1, %s7
  %s10 = scalar_select 0, %s9, %s7
  // Predicated region
  $region2: #{resblock_forward_nlc.4} parent=0 // pred_check
    _
  $region3: #{resblock_forward_nlc.4} parent=0 // pred_check_branch
    %12 = sbr.rel (0) target = $region5
  $region4: #{resblock_forward_nlc.4} parent=0 // pred_region
    _
  $region5: #{resblock_forward_nlc.4} parent=0 // pred_fallthru
    _
  // Predicated region
  $region6: #{resblock_forward_nlc.4} parent=0 // pred_check
    _
  $region7: #{resblock_forward_nlc.4} parent=0 // pred_check_branch
    %14 = sbr.rel (0) target = $region9
  $region8: #{resblock_forward_nlc.4} parent=0 // pred_region
    _
  $region9: #{resblock_forward_nlc.4} parent=0 // pred_fallthru
    _
  // Predicated region
  $region10: #{resblock_forward_nlc.4} parent=0 // pred_check
    _
  $region11: #{resblock_forward_nlc.4} parent=0 // pred_check_branch
    %16 = sbr.rel (0) target = $region13
  $region12: #{resblock_forward_nlc.4} parent=0 // pred_region
    _
  $region13: #{resblock_forward_nlc.4} parent=0 // pred_fallthru
    _
  // Predicated region
  $region14: #{resblock_forward_nlc.4} parent=0 // pred_check
    _
  $region15: #{resblock_forward_nlc.4} parent=0 // pred_check_branch
    %18 = sbr.rel (0) target = $region17
  $region16: #{resblock_forward_nlc.4} parent=0 // pred_region
    _
  $region17: #{resblock_forward_nlc.4} parent=0 // pred_fallthru
    _
  // Predicated region
  $region18: #{resblock_forward_nlc.4} parent=0 // pred_check
    _
  $region19: #{resblock_forward_nlc.4} parent=0 // pred_check_branch
    %20 = sbr.rel (0) target = $region21
  $region20: #{resblock_forward_nlc.4} parent=0 // pred_region
    _
  $region21: #{resblock_forward_nlc.4} parent=0 // pred_fallthru
    _
  // Predicated region
  $region22: #{resblock_forward_nlc.4} parent=0 // pred_check
    _
  $region23: #{resblock_forward_nlc.4} parent=0 // pred_check_branch
    %22 = sbr.rel (0) target = $region25
  $region24: #{resblock_forward_nlc.4} parent=0 // pred_region
    _
  $region25: #{resblock_forward_nlc.4} parent=0 // pred_fallthru
    _
  %v23 = vld [vmem:[%s0] sm:$0x1]
  %v24 = vld [vmem:[%s1] sm:$0xff]
  %v25 = vld [vmem:[%s1 + $0x8] sm:$0xff]
  %v26 = vld [vmem:[%s2] sm:$0xff]
  %v27 = vld [vmem:[%s2 + $0x8] sm:$0xff]
  %v28 = vld [vmem:[%s2 + $0x10] sm:$0xff]
  %v29 = vld [vmem:[%s2 + $0x18] sm:$0xf]
  %v30 = vld [vmem:[%s2 + $0x20] sm:$0xf]
  %v31 = vld [vmem:[%s2 + $0x28] sm:$0xf]
  %vm32 = vcmask 97280
  %v34 = vsel %vm32, %v24, 0
  %v37 = vsel %vm32, %v25, 0
  %vm39 = vcmask 1043456
  %v41 = vsel %vm39, %v29, 0
  %v44 = vsel %vm39, %v30, 0
  %v47 = vsel %vm39, %v31, 0
  %49 = vmatprep.subr.mxu0 %v27
  %50 = vmatpush1.msra.mxu0 %v26
  %51 = vmatprep.subr.mxu0 %v44
  %52 = vmatpush1.msra.mxu0 %v41
  %53 = vmatprep.subr.mxu0 0.0
  %54 = vmatpush1.msra.mxu0 0.0
  %55 = vmatprep.subr.mxu0 0.0
  %56 = vmatpush1.msra.mxu0 0.0
  %57 = vmatprep.subr.mxu0 0.0
  %58 = vmatpush1.msra.mxu0 0.0
  %59 = vmatprep.subr.mxu0 0.0
  %60 = vmatpush1.msra.mxu0 0.0
  %61 = vmatprep.subr.mxu0 0.0
  %62 = vmatpush1.msra.mxu0 0.0
  %63 = vmatprep.subr.mxu0 0.0
  %64 = vmatpush1.msra.mxu0 0.0
  %65 = vmatprep.subr.mxu0 0.0
  %66 = vmatpush1.msra.mxu0 0.0
  %67 = vmatprep.subr.mxu0 0.0
  %68 = vmatpush1.msra.mxu0 0.0
  %69 = vmatprep.subr.mxu0 0.0
  %70 = vmatpush1.msra.mxu0 0.0
  %71 = vmatprep.subr.mxu0 0.0
  %72 = vmatpush1.msra.mxu0 0.0
  %73 = vmatprep.subr.mxu0 0.0
  %74 = vmatpush1.msra.mxu0 0.0
  %75 = vmatprep.subr.mxu0 0.0
  %76 = vmatpush1.msra.mxu0 0.0
  %77 = vmatprep.subr.mxu0 0.0
  %78 = vmatpush1.msra.mxu0 0.0
  %79 = vmatprep.subr.mxu0 0.0
  %80 = vmatpush1.msra.mxu0 0.0
  %81 = vmatprep.subr.mxu0 0.0
  %82 = vmatpush1.msra.mxu0 0.0
  %83 = vmatprep.subr.mxu0 0.0
  %84 = vmatpush1.msra.mxu0 0.0
  %85 = vmatprep.subr.mxu0 0.0
  %86 = vmatpush1.msra.mxu0 0.0
  %87 = vmatprep.subr.mxu0 0.0
  %88 = vmatpush1.msra.mxu0 0.0
  %89 = vmatprep.subr.mxu0 0.0
  %90 = vmatpush1.msra.mxu0 0.0
  %91 = vmatprep.subr.mxu0 0.0
  %92 = vmatpush1.msra.mxu0 0.0
  %93 = vmatprep.subr.mxu0 0.0
  %94 = vmatpush1.msra.mxu0 0.0
  %95 = vmatprep.subr.mxu0 0.0
  %96 = vmatpush1.msra.mxu0 0.0
  %97 = vmatprep.subr.mxu0 0.0
  %98 = vmatpush1.msra.mxu0 0.0
  %99 = vmatprep.subr.mxu0 0.0
  %100 = vmatpush1.msra.mxu0 0.0
  %101 = vmatprep.subr.mxu0 0.0
  %102 = vmatpush1.msra.mxu0 0.0
  %103 = vmatprep.subr.mxu0 0.0
  %104 = vmatpush1.msra.mxu0 0.0
  %105 = vmatprep.subr.mxu0 0.0
  %106 = vmatpush1.msra.mxu0 0.0
  %107 = vmatprep.subr.mxu0 0.0
  %108 = vmatpush1.msra.mxu0 0.0
  %109 = vmatprep.subr.mxu0 0.0
  %110 = vmatpush1.msra.mxu0 0.0
  %111 = vmatprep.subr.mxu0 0.0
  %112 = vmatpush1.msra.mxu0 0.0
  %113 = vmatprep.mubr.f32.mxu0 0.0
  %114 = vmatmul.mubr.f32.gmra.mrb[0].mxu0 %v34
  %v115 = vpop.f32.mrb[0].mxu0
  %v116 = vadd.f32 0.0, %v115
  %v117 = vpop.f32.mrb[0].mxu0
  %v118 = vadd.f32 0.0, %v117
  %119 = vmatprep.mubr.f32.mxu0 0.0
  %120 = vmatmul.mubr.f32.gmra.mrb[0].mxu0 %v37
  %v121 = vpop.f32.mrb[0].mxu0
  %v122 = vadd.f32 0.0, %v121
  %v123 = vpop.f32.mrb[0].mxu0
  %v124 = vadd.f32 0.0, %v123
  %125 = vdwg.mxu0
  %126 = vmatprep.subr.mxu0 0.0
  %127 = vmatpush1.msra.mxu0 %v28
  %128 = vmatprep.subr.mxu0 0.0
  %129 = vmatpush1.msra.mxu0 %v47
  %130 = vmatprep.subr.mxu0 0.0
  %131 = vmatpush1.msra.mxu0 0.0
  %132 = vmatprep.subr.mxu0 0.0
  %133 = vmatpush1.msra.mxu0 0.0
  %134 = vmatprep.subr.mxu0 0.0
  %135 = vmatpush1.msra.mxu0 0.0
  %136 = vmatprep.subr.mxu0 0.0
  %137 = vmatpush1.msra.mxu0 0.0
  %138 = vmatprep.subr.mxu0 0.0
  %139 = vmatpush1.msra.mxu0 0.0
  %140 = vmatprep.subr.mxu0 0.0
  %141 = vmatpush1.msra.mxu0 0.0
  %142 = vmatprep.subr.mxu0 0.0
  %143 = vmatpush1.msra.mxu0 0.0
  %144 = vmatprep.subr.mxu0 0.0
  %145 = vmatpush1.msra.mxu0 0.0
  %146 = vmatprep.subr.mxu0 0.0
  %147 = vmatpush1.msra.mxu0 0.0
  %148 = vmatprep.subr.mxu0 0.0
  %149 = vmatpush1.msra.mxu0 0.0
  %150 = vmatprep.subr.mxu0 0.0
  %151 = vmatpush1.msra.mxu0 0.0
  %152 = vmatprep.subr.mxu0 0.0
  %153 = vmatpush1.msra.mxu0 0.0
  %154 = vmatprep.subr.mxu0 0.0
  %155 = vmatpush1.msra.mxu0 0.0
  %156 = vmatprep.subr.mxu0 0.0
  %157 = vmatpush1.msra.mxu0 0.0
  %158 = vmatprep.subr.mxu0 0.0
  %159 = vmatpush1.msra.mxu0 0.0
  %160 = vmatprep.subr.mxu0 0.0
  %161 = vmatpush1.msra.mxu0 0.0
  %162 = vmatprep.subr.mxu0 0.0
  %163 = vmatpush1.msra.mxu0 0.0
  %164 = vmatprep.subr.mxu0 0.0
  %165 = vmatpush1.msra.mxu0 0.0
  %166 = vmatprep.subr.mxu0 0.0
  %167 = vmatpush1.msra.mxu0 0.0
  %168 = vmatprep.subr.mxu0 0.0
  %169 = vmatpush1.msra.mxu0 0.0
  %170 = vmatprep.subr.mxu0 0.0
  %171 = vmatpush1.msra.mxu0 0.0
  %172 = vmatprep.subr.mxu0 0.0
  %173 = vmatpush1.msra.mxu0 0.0
  %174 = vmatprep.subr.mxu0 0.0
  %175 = vmatpush1.msra.mxu0 0.0
  %176 = vmatprep.subr.mxu0 0.0
  %177 = vmatpush1.msra.mxu0 0.0
  %178 = vmatprep.subr.mxu0 0.0
  %179 = vmatpush1.msra.mxu0 0.0
  %180 = vmatprep.subr.mxu0 0.0
  %181 = vmatpush1.msra.mxu0 0.0
  %182 = vmatprep.subr.mxu0 0.0
  %183 = vmatpush1.msra.mxu0 0.0
  %184 = vmatprep.subr.mxu0 0.0
  %185 = vmatpush1.msra.mxu0 0.0
  %186 = vmatprep.subr.mxu0 0.0
  %187 = vmatpush1.msra.mxu0 0.0
  %188 = vmatprep.subr.mxu0 0.0
  %189 = vmatpush1.msra.mxu0 0.0
  %190 = vmatprep.mubr.f32.mxu0 0.0
  %191 = vmatmul.mubr.f32.gmra.mrb[0].mxu0 %v34
  %v192 = vpop.f32.mrb[0].mxu0
  %v193 = vadd.f32 0.0, %v192
  %v194 = vpop.f32.mrb[0].mxu0
  %195 = vmatprep.mubr.f32.mxu0 0.0
  %196 = vmatmul.mubr.f32.gmra.mrb[0].mxu0 %v37
  %v197 = vpop.f32.mrb[0].mxu0
  %v198 = vadd.f32 0.0, %v197
  %v199 = vpop.f32.mrb[0].mxu0
  %200 = vdwg.mxu0
  %v201 = vld [vmem:[%s4] sm:$0x7]
  %v203 = vlaneseq
  %v204 = vshrl.u32 %v203, 7
  %v205 = vsub.s32 0, %v204
  %v206 = vrot.slane %v201, %v205
  %v207 = vlaneseq
  %v208 = vshrl.u32 %v207, 7
  %v209 = vsub.s32 1, %v208
  %v210 = vrot.slane %v201, %v209
  %v211 = vlaneseq
  %v212 = vshrl.u32 %v211, 7
  %v213 = vsub.s32 2, %v212
  %v214 = vrot.slane %v201, %v213
  %v218 = vmul.f32 %v116, %v206
  %v219 = vmul.f32 %v118, %v210
  %v220 = vmul.f32 %v193, %v214
  %v221 = vmul.f32 %v122, %v206
  %v222 = vmul.f32 %v124, %v210
  %v223 = vmul.f32 %v198, %v214
  %v224 = vld [vmem:[%s5] sm:$0x7]
  %v226 = vlaneseq
  %v227 = vshrl.u32 %v226, 7
  %v228 = vsub.s32 0, %v227
  %v229 = vrot.slane %v224, %v228
  %v230 = vlaneseq
  %v231 = vshrl.u32 %v230, 7
  %v232 = vsub.s32 1, %v231
  %v233 = vrot.slane %v224, %v232
  %v234 = vlaneseq
  %v235 = vshrl.u32 %v234, 7
  %v236 = vsub.s32 2, %v235
  %v237 = vrot.slane %v224, %v236
  %v241 = vadd.f32 %v218, %v229
  %v242 = vadd.f32 %v219, %v233
  %v243 = vadd.f32 %v220, %v237
  %v244 = vadd.f32 %v221, %v229
  %v245 = vadd.f32 %v222, %v233
  %v246 = vadd.f32 %v223, %v237
  %vm247 = vcmp.ge.f32.partialorder %v241, 0.0
  %vm248 = vcmp.ge.f32.partialorder %v242, 0.0
  %vm249 = vcmp.ge.f32.partialorder %v243, 0.0
  %vm250 = vcmp.ge.f32.partialorder %v244, 0.0
  %vm251 = vcmp.ge.f32.partialorder %v245, 0.0
  %vm252 = vcmp.ge.f32.partialorder %v246, 0.0
  %v254 = vlaneseq
  %v255 = vshrl.u32 %v254, 7
  %v256 = vsub.s32 0, %v255
  %v257 = vrot.slane %v23, %v256
  %258 = vset.pattern.permute.xlu0 0
  %259 = vperm.xlu0 %258, %v257
  %v260 = vpop.permute.xlu0 %259
  %v262 = vmul.f32 %v260, %v241
  %v263 = vmul.f32 %v260, %v242
  %v264 = vmul.f32 %v260, %v243
  %v265 = vmul.f32 %v260, %v244
  %v266 = vmul.f32 %v260, %v245
  %v267 = vmul.f32 %v260, %v246
  %v268 = vsel %vm247, %v241, %v262
  %v269 = vsel %vm248, %v242, %v263
  %v270 = vsel %vm249, %v243, %v264
  %v271 = vsel %vm250, %v244, %v265
  %v272 = vsel %vm251, %v245, %v266
  %v273 = vsel %vm252, %v246, %v267
  %v274 = vld [vmem:[%s3] sm:$0xff]
  %v275 = vld [vmem:[%s3 + $0x8] sm:$0xff]
  %v276 = vld [vmem:[%s3 + $0x10] sm:$0xff]
  %v277 = vld [vmem:[%s3 + $0x18] sm:$0xff]
  %v278 = vld [vmem:[%s3 + $0x20] sm:$0xff]
  %v279 = vld [vmem:[%s3 + $0x28] sm:$0xff]
  %v280 = vld [vmem:[%s3 + $0x30] sm:$0xff]
  %v281 = vld [vmem:[%s3 + $0x38] sm:$0xff]
  %v282 = vld [vmem:[%s3 + $0x40] sm:$0xff]
  %v283 = vld [vmem:[%s3 + $0x48] sm:$0xff]
  %v284 = vld [vmem:[%s3 + $0x50] sm:$0xff]
  %v285 = vld [vmem:[%s3 + $0x58] sm:$0xff]
  %v286 = vld [vmem:[%s3 + $0x60] sm:$0xff]
  %v287 = vld [vmem:[%s3 + $0x68] sm:$0xff]
  %v288 = vld [vmem:[%s3 + $0x70] sm:$0xff]
  %v289 = vld [vmem:[%s3 + $0x78] sm:$0xff]
  %v290 = vld [vmem:[%s3 + $0x80] sm:$0xff]
  %v291 = vld [vmem:[%s3 + $0x88] sm:$0xff]
  %v292 = vld [vmem:[%s3 + $0x90] sm:$0xff]
  %v293 = vld [vmem:[%s3 + $0x98] sm:$0xff]
  %v294 = vld [vmem:[%s3 + $0xa0] sm:$0xff]
  %v295 = vld [vmem:[%s3 + $0xa8] sm:$0xff]
  %v296 = vld [vmem:[%s3 + $0xb0] sm:$0xff]
  %v297 = vld [vmem:[%s3 + $0xb8] sm:$0xff]
  %v298 = vld [vmem:[%s3 + $0xc0] sm:$0xff]
  %v299 = vld [vmem:[%s3 + $0xc8] sm:$0xff]
  %v300 = vld [vmem:[%s3 + $0xd0] sm:$0xff]
  %v301 = vld [vmem:[%s3 + $0xd8] sm:$0xff]
  %v302 = vld [vmem:[%s3 + $0xe0] sm:$0xff]
  %v303 = vld [vmem:[%s3 + $0xe8] sm:$0xff]
  %v304 = vld [vmem:[%s3 + $0xf0] sm:$0xff]
  %v305 = vld [vmem:[%s3 + $0xf8] sm:$0xff]
  %v306 = vld [vmem:[%s3 + $0x100] sm:$0xff]
  %v307 = vld [vmem:[%s3 + $0x108] sm:$0xff]
  %v308 = vld [vmem:[%s3 + $0x110] sm:$0xff]
  %v309 = vld [vmem:[%s3 + $0x118] sm:$0xff]
  %v310 = vld [vmem:[%s3 + $0x120] sm:$0xff]
  %v311 = vld [vmem:[%s3 + $0x128] sm:$0xff]
  %v312 = vld [vmem:[%s3 + $0x130] sm:$0xff]
  %v313 = vld [vmem:[%s3 + $0x138] sm:$0xff]
  %v314 = vld [vmem:[%s3 + $0x140] sm:$0xff]
  %v315 = vld [vmem:[%s3 + $0x148] sm:$0xff]
  %v316 = vld [vmem:[%s3 + $0x150] sm:$0xff]
  %v317 = vld [vmem:[%s3 + $0x158] sm:$0xff]
  %v318 = vld [vmem:[%s3 + $0x160] sm:$0xff]
  %v319 = vld [vmem:[%s3 + $0x168] sm:$0xff]
  %v320 = vld [vmem:[%s3 + $0x170] sm:$0xff]
  %v321 = vld [vmem:[%s3 + $0x178] sm:$0xff]
  %v322 = vld [vmem:[%s3 + $0x180] sm:$0xff]
  %v323 = vld [vmem:[%s3 + $0x188] sm:$0xff]
  %v324 = vld [vmem:[%s3 + $0x190] sm:$0xff]
  %v325 = vld [vmem:[%s3 + $0x198] sm:$0xff]
  %v326 = vld [vmem:[%s3 + $0x1a0] sm:$0xff]
  %v327 = vld [vmem:[%s3 + $0x1a8] sm:$0xff]
  %v328 = vld [vmem:[%s3 + $0x1b0] sm:$0xff]
  %v329 = vld [vmem:[%s3 + $0x1b8] sm:$0xff]
  %v330 = vld [vmem:[%s3 + $0x1c0] sm:$0xff]
  %v331 = vld [vmem:[%s3 + $0x1c8] sm:$0xff]
  %v332 = vld [vmem:[%s3 + $0x1d0] sm:$0xff]
  %v333 = vld [vmem:[%s3 + $0x1d8] sm:$0xff]
  %v334 = vld [vmem:[%s3 + $0x1e0] sm:$0xff]
  %v335 = vld [vmem:[%s3 + $0x1e8] sm:$0xff]
  %v336 = vld [vmem:[%s3 + $0x1f0] sm:$0xff]
  %v337 = vld [vmem:[%s3 + $0x1f8] sm:$0xff]
  %v338 = vld [vmem:[%s3 + $0x200] sm:$0xff]
  %v339 = vld [vmem:[%s3 + $0x208] sm:$0xff]
  %v340 = vld [vmem:[%s3 + $0x210] sm:$0xff]
  %v341 = vld [vmem:[%s3 + $0x218] sm:$0xff]
  %v342 = vld [vmem:[%s3 + $0x220] sm:$0xff]
  %v343 = vld [vmem:[%s3 + $0x228] sm:$0xff]
  %v344 = vld [vmem:[%s3 + $0x230] sm:$0xff]
  %v345 = vld [vmem:[%s3 + $0x238] sm:$0xff]
  %v346 = vld [vmem:[%s3 + $0x240] sm:$0xff]
  %v347 = vld [vmem:[%s3 + $0x248] sm:$0xff]
  %v348 = vld [vmem:[%s3 + $0x250] sm:$0xff]
  %v349 = vld [vmem:[%s3 + $0x258] sm:$0xff]
  %v350 = vld [vmem:[%s3 + $0x260] sm:$0xff]
  %v351 = vld [vmem:[%s3 + $0x268] sm:$0xff]
  %v352 = vld [vmem:[%s3 + $0x270] sm:$0xff]
  %v353 = vld [vmem:[%s3 + $0x278] sm:$0xff]
  %v354 = vld [vmem:[%s3 + $0x280] sm:$0xff]
  %v355 = vld [vmem:[%s3 + $0x288] sm:$0xff]
  %v356 = vld [vmem:[%s3 + $0x290] sm:$0xff]
  %v357 = vld [vmem:[%s3 + $0x298] sm:$0xff]
  %v358 = vld [vmem:[%s3 + $0x2a0] sm:$0xff]
  %v359 = vld [vmem:[%s3 + $0x2a8] sm:$0xff]
  %v360 = vld [vmem:[%s3 + $0x2b0] sm:$0xff]
  %v361 = vld [vmem:[%s3 + $0x2b8] sm:$0xff]
  %v362 = vld [vmem:[%s3 + $0x2c0] sm:$0xff]
  %v363 = vld [vmem:[%s3 + $0x2c8] sm:$0xff]
  %v364 = vld [vmem:[%s3 + $0x2d0] sm:$0xff]
  %v365 = vld [vmem:[%s3 + $0x2d8] sm:$0xff]
  %v366 = vld [vmem:[%s3 + $0x2e0] sm:$0xff]
  %v367 = vld [vmem:[%s3 + $0x2e8] sm:$0xff]
  %v368 = vld [vmem:[%s3 + $0x2f0] sm:$0xff]
  %v369 = vld [vmem:[%s3 + $0x2f8] sm:$0xff]
  %v370 = vld [vmem:[%s3 + $0x300] sm:$0xff]
  %v371 = vld [vmem:[%s3 + $0x308] sm:$0xff]
  %v372 = vld [vmem:[%s3 + $0x310] sm:$0xff]
  %v373 = vld [vmem:[%s3 + $0x318] sm:$0xff]
  %v374 = vld [vmem:[%s3 + $0x320] sm:$0xff]
  %v375 = vld [vmem:[%s3 + $0x328] sm:$0xff]
  %v376 = vld [vmem:[%s3 + $0x330] sm:$0xff]
  %v377 = vld [vmem:[%s3 + $0x338] sm:$0xff]
  %v378 = vld [vmem:[%s3 + $0x340] sm:$0xff]
  %v379 = vld [vmem:[%s3 + $0x348] sm:$0xff]
  %v380 = vld [vmem:[%s3 + $0x350] sm:$0xff]
  %v381 = vld [vmem:[%s3 + $0x358] sm:$0xff]
  %v382 = vld [vmem:[%s3 + $0x360] sm:$0xff]
  %v383 = vld [vmem:[%s3 + $0x368] sm:$0xff]
  %v384 = vld [vmem:[%s3 + $0x370] sm:$0xff]
  %v385 = vld [vmem:[%s3 + $0x378] sm:$0xff]
  %v386 = vld [vmem:[%s3 + $0x380] sm:$0xff]
  %v387 = vld [vmem:[%s3 + $0x388] sm:$0xff]
  %v388 = vld [vmem:[%s3 + $0x390] sm:$0xff]
  %v389 = vld [vmem:[%s3 + $0x398] sm:$0xff]
  %v390 = vld [vmem:[%s3 + $0x3a0] sm:$0xff]
  %v391 = vld [vmem:[%s3 + $0x3a8] sm:$0xff]
  %v392 = vld [vmem:[%s3 + $0x3b0] sm:$0xff]
  %v393 = vld [vmem:[%s3 + $0x3b8] sm:$0xff]
  %v394 = vld [vmem:[%s3 + $0x3c0] sm:$0xff]
  %v395 = vld [vmem:[%s3 + $0x3c8] sm:$0xff]
  %v396 = vld [vmem:[%s3 + $0x3d0] sm:$0xff]
  %v397 = vld [vmem:[%s3 + $0x3d8] sm:$0xff]
  %v398 = vld [vmem:[%s3 + $0x3e0] sm:$0xff]
  %v399 = vld [vmem:[%s3 + $0x3e8] sm:$0xff]
  %v400 = vld [vmem:[%s3 + $0x3f0] sm:$0xff]
  %v401 = vld [vmem:[%s3 + $0x3f8] sm:$0xff]
  %v402 = vld [vmem:[%s3 + $0x400] sm:$0xff]
  %v403 = vld [vmem:[%s3 + $0x408] sm:$0xff]
  %v404 = vld [vmem:[%s3 + $0x410] sm:$0xff]
  %v405 = vld [vmem:[%s3 + $0x418] sm:$0xff]
  %v406 = vld [vmem:[%s3 + $0x420] sm:$0xff]
  %v407 = vld [vmem:[%s3 + $0x428] sm:$0xff]
  %v408 = vld [vmem:[%s3 + $0x430] sm:$0xff]
  %v409 = vld [vmem:[%s3 + $0x438] sm:$0xff]
  %v410 = vld [vmem:[%s3 + $0x440] sm:$0xff]
  %v411 = vld [vmem:[%s3 + $0x448] sm:$0xff]
  %v412 = vld [vmem:[%s3 + $0x450] sm:$0xff]
  %v413 = vld [vmem:[%s3 + $0x458] sm:$0xff]
  %v414 = vld [vmem:[%s3 + $0x460] sm:$0xff]
  %v415 = vld [vmem:[%s3 + $0x468] sm:$0xff]
  %v416 = vld [vmem:[%s3 + $0x470] sm:$0xff]
  %v417 = vld [vmem:[%s3 + $0x478] sm:$0xff]
  %418 = vmatprep.subr.mxu0 %v275
  %419 = vmatpush1.msra.mxu0 %v274
  %420 = vmatprep.subr.mxu0 %v278
  %421 = vmatpush1.msra.mxu0 %v277
  %422 = vmatprep.subr.mxu0 %v281
  %423 = vmatpush1.msra.mxu0 %v280
  %424 = vmatprep.subr.mxu0 %v284
  %425 = vmatpush1.msra.mxu0 %v283
  %426 = vmatprep.subr.mxu0 %v287
  %427 = vmatpush1.msra.mxu0 %v286
  %428 = vmatprep.subr.mxu0 %v290
  %429 = vmatpush1.msra.mxu0 %v289
  %430 = vmatprep.subr.mxu0 %v293
  %431 = vmatpush1.msra.mxu0 %v292
  %432 = vmatprep.subr.mxu0 %v296
  %433 = vmatpush1.msra.mxu0 %v295
  %434 = vmatprep.subr.mxu0 %v299
  %435 = vmatpush1.msra.mxu0 %v298
  %436 = vmatprep.subr.mxu0 %v302
  %437 = vmatpush1.msra.mxu0 %v301
  %438 = vmatprep.subr.mxu0 %v305
  %439 = vmatpush1.msra.mxu0 %v304
  %440 = vmatprep.subr.mxu0 %v308
  %441 = vmatpush1.msra.mxu0 %v307
  %442 = vmatprep.subr.mxu0 %v311
  %443 = vmatpush1.msra.mxu0 %v310
  %444 = vmatprep.subr.mxu0 %v314
  %445 = vmatpush1.msra.mxu0 %v313
  %446 = vmatprep.subr.mxu0 %v317
  %447 = vmatpush1.msra.mxu0 %v316
  %448 = vmatprep.subr.mxu0 %v320
  %449 = vmatpush1.msra.mxu0 %v319
  %450 = vmatprep.subr.mxu0 %v323
  %451 = vmatpush1.msra.mxu0 %v322
  %452 = vmatprep.subr.mxu0 %v326
  %453 = vmatpush1.msra.mxu0 %v325
  %454 = vmatprep.subr.mxu0 %v329
  %455 = vmatpush1.msra.mxu0 %v328
  %456 = vmatprep.subr.mxu0 %v332
  %457 = vmatpush1.msra.mxu0 %v331
  %458 = vmatprep.subr.mxu0 %v335
  %459 = vmatpush1.msra.mxu0 %v334
  %460 = vmatprep.subr.mxu0 %v338
  %461 = vmatpush1.msra.mxu0 %v337
  %462 = vmatprep.subr.mxu0 %v341
  %463 = vmatpush1.msra.mxu0 %v340
  %464 = vmatprep.subr.mxu0 %v344
  %465 = vmatpush1.msra.mxu0 %v343
  %466 = vmatprep.subr.mxu0 %v347
  %467 = vmatpush1.msra.mxu0 %v346
  %468 = vmatprep.subr.mxu0 %v350
  %469 = vmatpush1.msra.mxu0 %v349
  %470 = vmatprep.subr.mxu0 %v353
  %471 = vmatpush1.msra.mxu0 %v352
  %472 = vmatprep.subr.mxu0 %v356
  %473 = vmatpush1.msra.mxu0 %v355
  %474 = vmatprep.subr.mxu0 %v359
  %475 = vmatpush1.msra.mxu0 %v358
  %476 = vmatprep.subr.mxu0 %v362
  %477 = vmatpush1.msra.mxu0 %v361
  %478 = vmatprep.subr.mxu0 %v365
  %479 = vmatpush1.msra.mxu0 %v364
  %480 = vmatprep.subr.mxu0 %v368
  %481 = vmatpush1.msra.mxu0 %v367
  %482 = vmatprep.mubr.f32.mxu0 %v269
  %483 = vmatmul.mubr.f32.gmra.mrb[0].mxu0 %v268
  %v484 = vpop.f32.mrb[0].mxu0
  %v485 = vadd.f32 0.0, %v484
  %v486 = vpop.f32.mrb[0].mxu0
  %v487 = vadd.f32 0.0, %v486
  %488 = vmatprep.mubr.f32.mxu0 %v272
  %489 = vmatmul.mubr.f32.gmra.mrb[0].mxu0 %v271
  %v490 = vpop.f32.mrb[0].mxu0
  %v491 = vadd.f32 0.0, %v490
  %v492 = vpop.f32.mrb[0].mxu0
  %v493 = vadd.f32 0.0, %v492
  %494 = vdwg.mxu0
  %495 = vmatprep.subr.mxu0 %v371
  %496 = vmatpush1.msra.mxu0 %v370
  %497 = vmatprep.subr.mxu0 %v374
  %498 = vmatpush1.msra.mxu0 %v373
  %499 = vmatprep.subr.mxu0 %v377
  %500 = vmatpush1.msra.mxu0 %v376
  %501 = vmatprep.subr.mxu0 %v380
  %502 = vmatpush1.msra.mxu0 %v379
  %503 = vmatprep.subr.mxu0 %v383
  %504 = vmatpush1.msra.mxu0 %v382
  %505 = vmatprep.subr.mxu0 %v386
  %506 = vmatpush1.msra.mxu0 %v385
  %507 = vmatprep.subr.mxu0 %v389
  %508 = vmatpush1.msra.mxu0 %v388
  %509 = vmatprep.subr.mxu0 %v392
  %510 = vmatpush1.msra.mxu0 %v391
  %511 = vmatprep.subr.mxu0 %v395
  %512 = vmatpush1.msra.mxu0 %v394
  %513 = vmatprep.subr.mxu0 %v398
  %514 = vmatpush1.msra.mxu0 %v397
  %515 = vmatprep.subr.mxu0 %v401
  %516 = vmatpush1.msra.mxu0 %v400
  %517 = vmatprep.subr.mxu0 %v404
  %518 = vmatpush1.msra.mxu0 %v403
  %519 = vmatprep.subr.mxu0 %v407
  %520 = vmatpush1.msra.mxu0 %v406
  %521 = vmatprep.subr.mxu0 %v410
  %522 = vmatpush1.msra.mxu0 %v409
  %523 = vmatprep.subr.mxu0 %v413
  %524 = vmatpush1.msra.mxu0 %v412
  %525 = vmatprep.subr.mxu0 %v416
  %526 = vmatpush1.msra.mxu0 %v415
  %527 = vmatprep.subr.mxu0 0.0
  %528 = vmatpush1.msra.mxu0 0.0
  %529 = vmatprep.subr.mxu0 0.0
  %530 = vmatpush1.msra.mxu0 0.0
  %531 = vmatprep.subr.mxu0 0.0
  %532 = vmatpush1.msra.mxu0 0.0
  %533 = vmatprep.subr.mxu0 0.0
  %534 = vmatpush1.msra.mxu0 0.0
  %535 = vmatprep.subr.mxu0 0.0
  %536 = vmatpush1.msra.mxu0 0.0
  %537 = vmatprep.subr.mxu0 0.0
  %538 = vmatpush1.msra.mxu0 0.0
  %539 = vmatprep.subr.mxu0 0.0
  %540 = vmatpush1.msra.mxu0 0.0
  %541 = vmatprep.subr.mxu0 0.0
  %542 = vmatpush1.msra.mxu0 0.0
  %543 = vmatprep.subr.mxu0 0.0
  %544 = vmatpush1.msra.mxu0 0.0
  %545 = vmatprep.subr.mxu0 0.0
  %546 = vmatpush1.msra.mxu0 0.0
  %547 = vmatprep.subr.mxu0 0.0
  %548 = vmatpush1.msra.mxu0 0.0
  %549 = vmatprep.subr.mxu0 0.0
  %550 = vmatpush1.msra.mxu0 0.0
  %551 = vmatprep.subr.mxu0 0.0
  %552 = vmatpush1.msra.mxu0 0.0
  %553 = vmatprep.subr.mxu0 0.0
  %554 = vmatpush1.msra.mxu0 0.0
  %555 = vmatprep.subr.mxu0 0.0
  %556 = vmatpush1.msra.mxu0 0.0
  %557 = vmatprep.subr.mxu0 0.0
  %558 = vmatpush1.msra.mxu0 0.0
  %559 = vmatprep.mubr.f32.mxu0 0.0
  %560 = vmatmul.mubr.f32.gmra.mrb[0].mxu0 %v270
  %v561 = vpop.f32.mrb[0].mxu0
  %v562 = vadd.f32 %v485, %v561
  %v563 = vpop.f32.mrb[0].mxu0
  %v564 = vadd.f32 %v487, %v563
  %565 = vmatprep.mubr.f32.mxu0 0.0
  %566 = vmatmul.mubr.f32.gmra.mrb[0].mxu0 %v273
  %v567 = vpop.f32.mrb[0].mxu0
  %v568 = vadd.f32 %v491, %v567
  %v569 = vpop.f32.mrb[0].mxu0
  %v570 = vadd.f32 %v493, %v569
  %571 = vdwg.mxu0
  %572 = vmatprep.subr.mxu0 0.0
  %573 = vmatpush1.msra.mxu0 %v276
  %574 = vmatprep.subr.mxu0 0.0
  %575 = vmatpush1.msra.mxu0 %v279
  %576 = vmatprep.subr.mxu0 0.0
  %577 = vmatpush1.msra.mxu0 %v282
  %578 = vmatprep.subr.mxu0 0.0
  %579 = vmatpush1.msra.mxu0 %v285
  %580 = vmatprep.subr.mxu0 0.0
  %581 = vmatpush1.msra.mxu0 %v288
  %582 = vmatprep.subr.mxu0 0.0
  %583 = vmatpush1.msra.mxu0 %v291
  %584 = vmatprep.subr.mxu0 0.0
  %585 = vmatpush1.msra.mxu0 %v294
  %586 = vmatprep.subr.mxu0 0.0
  %587 = vmatpush1.msra.mxu0 %v297
  %588 = vmatprep.subr.mxu0 0.0
  %589 = vmatpush1.msra.mxu0 %v300
  %590 = vmatprep.subr.mxu0 0.0
  %591 = vmatpush1.msra.mxu0 %v303
  %592 = vmatprep.subr.mxu0 0.0
  %593 = vmatpush1.msra.mxu0 %v306
  %594 = vmatprep.subr.mxu0 0.0
  %595 = vmatpush1.msra.mxu0 %v309
  %596 = vmatprep.subr.mxu0 0.0
  %597 = vmatpush1.msra.mxu0 %v312
  %598 = vmatprep.subr.mxu0 0.0
  %599 = vmatpush1.msra.mxu0 %v315
  %600 = vmatprep.subr.mxu0 0.0
  %601 = vmatpush1.msra.mxu0 %v318
  %602 = vmatprep.subr.mxu0 0.0
  %603 = vmatpush1.msra.mxu0 %v321
  %604 = vmatprep.subr.mxu0 0.0
  %605 = vmatpush1.msra.mxu0 %v324
  %606 = vmatprep.subr.mxu0 0.0
  %607 = vmatpush1.msra.mxu0 %v327
  %608 = vmatprep.subr.mxu0 0.0
  %609 = vmatpush1.msra.mxu0 %v330
  %610 = vmatprep.subr.mxu0 0.0
  %611 = vmatpush1.msra.mxu0 %v333
  %612 = vmatprep.subr.mxu0 0.0
  %613 = vmatpush1.msra.mxu0 %v336
  %614 = vmatprep.subr.mxu0 0.0
  %615 = vmatpush1.msra.mxu0 %v339
  %616 = vmatprep.subr.mxu0 0.0
  %617 = vmatpush1.msra.mxu0 %v342
  %618 = vmatprep.subr.mxu0 0.0
  %619 = vmatpush1.msra.mxu0 %v345
  %620 = vmatprep.subr.mxu0 0.0
  %621 = vmatpush1.msra.mxu0 %v348
  %622 = vmatprep.subr.mxu0 0.0
  %623 = vmatpush1.msra.mxu0 %v351
  %624 = vmatprep.subr.mxu0 0.0
  %625 = vmatpush1.msra.mxu0 %v354
  %626 = vmatprep.subr.mxu0 0.0
  %627 = vmatpush1.msra.mxu0 %v357
  %628 = vmatprep.subr.mxu0 0.0
  %629 = vmatpush1.msra.mxu0 %v360
  %630 = vmatprep.subr.mxu0 0.0
  %631 = vmatpush1.msra.mxu0 %v363
  %632 = vmatprep.subr.mxu0 0.0
  %633 = vmatpush1.msra.mxu0 %v366
  %634 = vmatprep.subr.mxu0 0.0
  %635 = vmatpush1.msra.mxu0 %v369
  %636 = vmatprep.mubr.f32.mxu0 %v269
  %637 = vmatmul.mubr.f32.gmra.mrb[0].mxu0 %v268
  %v638 = vpop.f32.mrb[0].mxu0
  %v639 = vadd.f32 0.0, %v638
  %v640 = vpop.f32.mrb[0].mxu0
  %641 = vmatprep.mubr.f32.mxu0 %v272
  %642 = vmatmul.mubr.f32.gmra.mrb[0].mxu0 %v271
  %v643 = vpop.f32.mrb[0].mxu0
  %v644 = vadd.f32 0.0, %v643
  %v645 = vpop.f32.mrb[0].mxu0
  %646 = vdwg.mxu0
  %647 = vmatprep.subr.mxu0 0.0
  %648 = vmatpush1.msra.mxu0 %v372
  %649 = vmatprep.subr.mxu0 0.0
  %650 = vmatpush1.msra.mxu0 %v375
  %651 = vmatprep.subr.mxu0 0.0
  %652 = vmatpush1.msra.mxu0 %v378
  %653 = vmatprep.subr.mxu0 0.0
  %654 = vmatpush1.msra.mxu0 %v381
  %655 = vmatprep.subr.mxu0 0.0
  %656 = vmatpush1.msra.mxu0 %v384
  %657 = vmatprep.subr.mxu0 0.0
  %658 = vmatpush1.msra.mxu0 %v387
  %659 = vmatprep.subr.mxu0 0.0
  %660 = vmatpush1.msra.mxu0 %v390
  %661 = vmatprep.subr.mxu0 0.0
  %662 = vmatpush1.msra.mxu0 %v393
  %663 = vmatprep.subr.mxu0 0.0
  %664 = vmatpush1.msra.mxu0 %v396
  %665 = vmatprep.subr.mxu0 0.0
  %666 = vmatpush1.msra.mxu0 %v399
  %667 = vmatprep.subr.mxu0 0.0
  %668 = vmatpush1.msra.mxu0 %v402
  %669 = vmatprep.subr.mxu0 0.0
  %670 = vmatpush1.msra.mxu0 %v405
  %671 = vmatprep.subr.mxu0 0.0
  %672 = vmatpush1.msra.mxu0 %v408
  %673 = vmatprep.subr.mxu0 0.0
  %674 = vmatpush1.msra.mxu0 %v411
  %675 = vmatprep.subr.mxu0 0.0
  %676 = vmatpush1.msra.mxu0 %v414
  %677 = vmatprep.subr.mxu0 0.0
  %678 = vmatpush1.msra.mxu0 %v417
  %679 = vmatprep.subr.mxu0 0.0
  %680 = vmatpush1.msra.mxu0 0.0
  %681 = vmatprep.subr.mxu0 0.0
  %682 = vmatpush1.msra.mxu0 0.0
  %683 = vmatprep.subr.mxu0 0.0
  %684 = vmatpush1.msra.mxu0 0.0
  %685 = vmatprep.subr.mxu0 0.0
  %686 = vmatpush1.msra.mxu0 0.0
  %687 = vmatprep.subr.mxu0 0.0
  %688 = vmatpush1.msra.mxu0 0.0
  %689 = vmatprep.subr.mxu0 0.0
  %690 = vmatpush1.msra.mxu0 0.0
  %691 = vmatprep.subr.mxu0 0.0
  %692 = vmatpush1.msra.mxu0 0.0
  %693 = vmatprep.subr.mxu0 0.0
  %694 = vmatpush1.msra.mxu0 0.0
  %695 = vmatprep.subr.mxu0 0.0
  %696 = vmatpush1.msra.mxu0 0.0
  %697 = vmatprep.subr.mxu0 0.0
  %698 = vmatpush1.msra.mxu0 0.0
  %699 = vmatprep.subr.mxu0 0.0
  %700 = vmatpush1.msra.mxu0 0.0
  %701 = vmatprep.subr.mxu0 0.0
  %702 = vmatpush1.msra.mxu0 0.0
  %703 = vmatprep.subr.mxu0 0.0
  %704 = vmatpush1.msra.mxu0 0.0
  %705 = vmatprep.subr.mxu0 0.0
  %706 = vmatpush1.msra.mxu0 0.0
  %707 = vmatprep.subr.mxu0 0.0
  %708 = vmatpush1.msra.mxu0 0.0
  %709 = vmatprep.subr.mxu0 0.0
  %710 = vmatpush1.msra.mxu0 0.0
  %711 = vmatprep.mubr.f32.mxu0 0.0
  %712 = vmatmul.mubr.f32.gmra.mrb[0].mxu0 %v270
  %v713 = vpop.f32.mrb[0].mxu0
  %v714 = vadd.f32 %v639, %v713
  %v715 = vpop.f32.mrb[0].mxu0
  %716 = vmatprep.mubr.f32.mxu0 0.0
  %717 = vmatmul.mubr.f32.gmra.mrb[0].mxu0 %v273
  %v718 = vpop.f32.mrb[0].mxu0
  %v719 = vadd.f32 %v644, %v718
  %v720 = vpop.f32.mrb[0].mxu0
  %721 = vdwg.mxu0
  %vm722 = vcmask 130048
  %v724 = vsel %vm722, 1.0, 0
  %726 = vmatprep.subr.mxu0 %v564
  %727 = vmatpush1.msra.mxu0 %v562
  %728 = vmatprep.subr.mxu0 %v570
  %729 = vmatpush1.msra.mxu0 %v568
  %730 = vmatprep.subr.mxu0 0.0
  %731 = vmatpush1.msra.mxu0 0.0
  %732 = vmatprep.subr.mxu0 0.0
  %733 = vmatpush1.msra.mxu0 0.0
  %734 = vmatprep.subr.mxu0 0.0
  %735 = vmatpush1.msra.mxu0 0.0
  %736 = vmatprep.subr.mxu0 0.0
  %737 = vmatpush1.msra.mxu0 0.0
  %738 = vmatprep.subr.mxu0 0.0
  %739 = vmatpush1.msra.mxu0 0.0
  %740 = vmatprep.subr.mxu0 0.0
  %741 = vmatpush1.msra.mxu0 0.0
  %742 = vmatprep.subr.mxu0 0.0
  %743 = vmatpush1.msra.mxu0 0.0
  %744 = vmatprep.subr.mxu0 0.0
  %745 = vmatpush1.msra.mxu0 0.0
  %746 = vmatprep.subr.mxu0 0.0
  %747 = vmatpush1.msra.mxu0 0.0
  %748 = vmatprep.subr.mxu0 0.0
  %749 = vmatpush1.msra.mxu0 0.0
  %750 = vmatprep.subr.mxu0 0.0
  %751 = vmatpush1.msra.mxu0 0.0
  %752 = vmatprep.subr.mxu0 0.0
  %753 = vmatpush1.msra.mxu0 0.0
  %754 = vmatprep.subr.mxu0 0.0
  %755 = vmatpush1.msra.mxu0 0.0
  %756 = vmatprep.subr.mxu0 0.0
  %757 = vmatpush1.msra.mxu0 0.0
  %758 = vmatprep.subr.mxu0 0.0
  %759 = vmatpush1.msra.mxu0 0.0
  %760 = vmatprep.subr.mxu0 0.0
  %761 = vmatpush1.msra.mxu0 0.0
  %762 = vmatprep.subr.mxu0 0.0
  %763 = vmatpush1.msra.mxu0 0.0
  %764 = vmatprep.subr.mxu0 0.0
  %765 = vmatpush1.msra.mxu0 0.0
  %766 = vmatprep.subr.mxu0 0.0
  %767 = vmatpush1.msra.mxu0 0.0
  %768 = vmatprep.subr.mxu0 0.0
  %769 = vmatpush1.msra.mxu0 0.0
  %770 = vmatprep.subr.mxu0 0.0
  %771 = vmatpush1.msra.mxu0 0.0
  %772 = vmatprep.subr.mxu0 0.0
  %773 = vmatpush1.msra.mxu0 0.0
  %774 = vmatprep.subr.mxu0 0.0
  %775 = vmatpush1.msra.mxu0 0.0
  %776 = vmatprep.subr.mxu0 0.0
  %777 = vmatpush1.msra.mxu0 0.0
  %778 = vmatprep.subr.mxu0 0.0
  %779 = vmatpush1.msra.mxu0 0.0
  %780 = vmatprep.subr.mxu0 0.0
  %781 = vmatpush1.msra.mxu0 0.0
  %782 = vmatprep.subr.mxu0 0.0
  %783 = vmatpush1.msra.mxu0 0.0
  %784 = vmatprep.subr.mxu0 0.0
  %785 = vmatpush1.msra.mxu0 0.0
  %786 = vmatprep.subr.mxu0 0.0
  %787 = vmatpush1.msra.mxu0 0.0
  %788 = vmatprep.subr.mxu0 0.0
  %789 = vmatpush1.msra.mxu0 0.0
  %790 = vmatprep.mubr.f32.mxu0 0.0
  %791 = vmatmul.mubr.f32.gmra.mrb[0].mxu0 %v724
  %v792 = vpop.f32.mrb[0].mxu0
  %v793 = vadd.f32 0.0, %v792
  %v794 = vpop.f32.mrb[0].mxu0
  %v795 = vadd.f32 0.0, %v794
  %796 = vdwg.mxu0
  %797 = vmatprep.subr.mxu0 0.0
  %798 = vmatpush1.msra.mxu0 %v714
  %799 = vmatprep.subr.mxu0 0.0
  %800 = vmatpush1.msra.mxu0 %v719
  %801 = vmatprep.subr.mxu0 0.0
  %802 = vmatpush1.msra.mxu0 0.0
  %803 = vmatprep.subr.mxu0 0.0
  %804 = vmatpush1.msra.mxu0 0.0
  %805 = vmatprep.subr.mxu0 0.0
  %806 = vmatpush1.msra.mxu0 0.0
  %807 = vmatprep.subr.mxu0 0.0
  %808 = vmatpush1.msra.mxu0 0.0
  %809 = vmatprep.subr.mxu0 0.0
  %810 = vmatpush1.msra.mxu0 0.0
  %811 = vmatprep.subr.mxu0 0.0
  %812 = vmatpush1.msra.mxu0 0.0
  %813 = vmatprep.subr.mxu0 0.0
  %814 = vmatpush1.msra.mxu0 0.0
  %815 = vmatprep.subr.mxu0 0.0
  %816 = vmatpush1.msra.mxu0 0.0
  %817 = vmatprep.subr.mxu0 0.0
  %818 = vmatpush1.msra.mxu0 0.0
  %819 = vmatprep.subr.mxu0 0.0
  %820 = vmatpush1.msra.mxu0 0.0
  %821 = vmatprep.subr.mxu0 0.0
  %822 = vmatpush1.msra.mxu0 0.0
  %823 = vmatprep.subr.mxu0 0.0
  %824 = vmatpush1.msra.mxu0 0.0
  %825 = vmatprep.subr.mxu0 0.0
  %826 = vmatpush1.msra.mxu0 0.0
  %827 = vmatprep.subr.mxu0 0.0
  %828 = vmatpush1.msra.mxu0 0.0
  %829 = vmatprep.subr.mxu0 0.0
  %830 = vmatpush1.msra.mxu0 0.0
  %831 = vmatprep.subr.mxu0 0.0
  %832 = vmatpush1.msra.mxu0 0.0
  %833 = vmatprep.subr.mxu0 0.0
  %834 = vmatpush1.msra.mxu0 0.0
  %835 = vmatprep.subr.mxu0 0.0
  %836 = vmatpush1.msra.mxu0 0.0
  %837 = vmatprep.subr.mxu0 0.0
  %838 = vmatpush1.msra.mxu0 0.0
  %839 = vmatprep.subr.mxu0 0.0
  %840 = vmatpush1.msra.mxu0 0.0
  %841 = vmatprep.subr.mxu0 0.0
  %842 = vmatpush1.msra.mxu0 0.0
  %843 = vmatprep.subr.mxu0 0.0
  %844 = vmatpush1.msra.mxu0 0.0
  %845 = vmatprep.subr.mxu0 0.0
  %846 = vmatpush1.msra.mxu0 0.0
  %847 = vmatprep.subr.mxu0 0.0
  %848 = vmatpush1.msra.mxu0 0.0
  %849 = vmatprep.subr.mxu0 0.0
  %850 = vmatpush1.msra.mxu0 0.0
  %851 = vmatprep.subr.mxu0 0.0
  %852 = vmatpush1.msra.mxu0 0.0
  %853 = vmatprep.subr.mxu0 0.0
  %854 = vmatpush1.msra.mxu0 0.0
  %855 = vmatprep.subr.mxu0 0.0
  %856 = vmatpush1.msra.mxu0 0.0
  %857 = vmatprep.subr.mxu0 0.0
  %858 = vmatpush1.msra.mxu0 0.0
  %859 = vmatprep.subr.mxu0 0.0
  %860 = vmatpush1.msra.mxu0 0.0
  %861 = vmatprep.mubr.f32.mxu0 0.0
  %862 = vmatmul.mubr.f32.gmra.mrb[0].mxu0 %v724
  %v863 = vpop.f32.mrb[0].mxu0
  %v864 = vadd.f32 0.0, %v863
  %v865 = vpop.f32.mrb[0].mxu0
  %866 = vdwg.mxu0
  %867 = vst [vmem:[%s6] sm:$0xff] %v793
  %868 = vst [vmem:[%s6 + $0x8] sm:$0xff] %v795
  %869 = vst [vmem:[%s6 + $0x10] sm:$0xff] %v864
  %v870 = vmul.f32 %v562, %v562
  %v871 = vmul.f32 %v564, %v564
  %v872 = vmul.f32 %v714, %v714
  %v873 = vmul.f32 %v568, %v568
  %v874 = vmul.f32 %v570, %v570
  %v875 = vmul.f32 %v719, %v719
  %876 = vmatprep.subr.mxu0 %v871
  %877 = vmatpush1.msra.mxu0 %v870
  %878 = vmatprep.subr.mxu0 %v874
  %879 = vmatpush1.msra.mxu0 %v873
  %880 = vmatprep.subr.mxu0 0.0
  %881 = vmatpush1.msra.mxu0 0.0
  %882 = vmatprep.subr.mxu0 0.0
  %883 = vmatpush1.msra.mxu0 0.0
  %884 = vmatprep.subr.mxu0 0.0
  %885 = vmatpush1.msra.mxu0 0.0
  %886 = vmatprep.subr.mxu0 0.0
  %887 = vmatpush1.msra.mxu0 0.0
  %888 = vmatprep.subr.mxu0 0.0
  %889 = vmatpush1.msra.mxu0 0.0
  %890 = vmatprep.subr.mxu0 0.0
  %891 = vmatpush1.msra.mxu0 0.0
  %892 = vmatprep.subr.mxu0 0.0
  %893 = vmatpush1.msra.mxu0 0.0
  %894 = vmatprep.subr.mxu0 0.0
  %895 = vmatpush1.msra.mxu0 0.0
  %896 = vmatprep.subr.mxu0 0.0
  %897 = vmatpush1.msra.mxu0 0.0
  %898 = vmatprep.subr.mxu0 0.0
  %899 = vmatpush1.msra.mxu0 0.0
  %900 = vmatprep.subr.mxu0 0.0
  %901 = vmatpush1.msra.mxu0 0.0
  %902 = vmatprep.subr.mxu0 0.0
  %903 = vmatpush1.msra.mxu0 0.0
  %904 = vmatprep.subr.mxu0 0.0
  %905 = vmatpush1.msra.mxu0 0.0
  %906 = vmatprep.subr.mxu0 0.0
  %907 = vmatpush1.msra.mxu0 0.0
  %908 = vmatprep.subr.mxu0 0.0
  %909 = vmatpush1.msra.mxu0 0.0
  %910 = vmatprep.subr.mxu0 0.0
  %911 = vmatpush1.msra.mxu0 0.0
  %912 = vmatprep.subr.mxu0 0.0
  %913 = vmatpush1.msra.mxu0 0.0
  %914 = vmatprep.subr.mxu0 0.0
  %915 = vmatpush1.msra.mxu0 0.0
  %916 = vmatprep.subr.mxu0 0.0
  %917 = vmatpush1.msra.mxu0 0.0
  %918 = vmatprep.subr.mxu0 0.0
  %919 = vmatpush1.msra.mxu0 0.0
  %920 = vmatprep.subr.mxu0 0.0
  %921 = vmatpush1.msra.mxu0 0.0
  %922 = vmatprep.subr.mxu0 0.0
  %923 = vmatpush1.msra.mxu0 0.0
  %924 = vmatprep.subr.mxu0 0.0
  %925 = vmatpush1.msra.mxu0 0.0
  %926 = vmatprep.subr.mxu0 0.0
  %927 = vmatpush1.msra.mxu0 0.0
  %928 = vmatprep.subr.mxu0 0.0
  %929 = vmatpush1.msra.mxu0 0.0
  %930 = vmatprep.subr.mxu0 0.0
  %931 = vmatpush1.msra.mxu0 0.0
  %932 = vmatprep.subr.mxu0 0.0
  %933 = vmatpush1.msra.mxu0 0.0
  %934 = vmatprep.subr.mxu0 0.0
  %935 = vmatpush1.msra.mxu0 0.0
  %936 = vmatprep.subr.mxu0 0.0
  %937 = vmatpush1.msra.mxu0 0.0
  %938 = vmatprep.subr.mxu0 0.0
  %939 = vmatpush1.msra.mxu0 0.0
  %940 = vmatprep.mubr.f32.mxu0 0.0
  %941 = vmatmul.mubr.f32.gmra.mrb[0].mxu0 %v724
  %v942 = vpop.f32.mrb[0].mxu0
  %v943 = vadd.f32 0.0, %v942
  %v944 = vpop.f32.mrb[0].mxu0
  %v945 = vadd.f32 0.0, %v944
  %946 = vdwg.mxu0
  %947 = vmatprep.subr.mxu0 0.0
  %948 = vmatpush1.msra.mxu0 %v872
  %949 = vmatprep.subr.mxu0 0.0
  %950 = vmatpush1.msra.mxu0 %v875
  %951 = vmatprep.subr.mxu0 0.0
  %952 = vmatpush1.msra.mxu0 0.0
  %953 = vmatprep.subr.mxu0 0.0
  %954 = vmatpush1.msra.mxu0 0.0
  %955 = vmatprep.subr.mxu0 0.0
  %956 = vmatpush1.msra.mxu0 0.0
  %957 = vmatprep.subr.mxu0 0.0
  %958 = vmatpush1.msra.mxu0 0.0
  %959 = vmatprep.subr.mxu0 0.0
  %960 = vmatpush1.msra.mxu0 0.0
  %961 = vmatprep.subr.mxu0 0.0
  %962 = vmatpush1.msra.mxu0 0.0
  %963 = vmatprep.subr.mxu0 0.0
  %964 = vmatpush1.msra.mxu0 0.0
  %965 = vmatprep.subr.mxu0 0.0
  %966 = vmatpush1.msra.mxu0 0.0
  %967 = vmatprep.subr.mxu0 0.0
  %968 = vmatpush1.msra.mxu0 0.0
  %969 = vmatprep.subr.mxu0 0.0
  %970 = vmatpush1.msra.mxu0 0.0
  %971 = vmatprep.subr.mxu0 0.0
  %972 = vmatpush1.msra.mxu0 0.0
  %973 = vmatprep.subr.mxu0 0.0
  %974 = vmatpush1.msra.mxu0 0.0
  %975 = vmatprep.subr.mxu0 0.0
  %976 = vmatpush1.msra.mxu0 0.0
  %977 = vmatprep.subr.mxu0 0.0
  %978 = vmatpush1.msra.mxu0 0.0
  %979 = vmatprep.subr.mxu0 0.0
  %980 = vmatpush1.msra.mxu0 0.0
  %981 = vmatprep.subr.mxu0 0.0
  %982 = vmatpush1.msra.mxu0 0.0
  %983 = vmatprep.subr.mxu0 0.0
  %984 = vmatpush1.msra.mxu0 0.0
  %985 = vmatprep.subr.mxu0 0.0
  %986 = vmatpush1.msra.mxu0 0.0
  %987 = vmatprep.subr.mxu0 0.0
  %988 = vmatpush1.msra.mxu0 0.0
  %989 = vmatprep.subr.mxu0 0.0
  %990 = vmatpush1.msra.mxu0 0.0
  %991 = vmatprep.subr.mxu0 0.0
  %992 = vmatpush1.msra.mxu0 0.0
  %993 = vmatprep.subr.mxu0 0.0
  %994 = vmatpush1.msra.mxu0 0.0
  %995 = vmatprep.subr.mxu0 0.0
  %996 = vmatpush1.msra.mxu0 0.0
  %997 = vmatprep.subr.mxu0 0.0
  %998 = vmatpush1.msra.mxu0 0.0
  %999 = vmatprep.subr.mxu0 0.0
  %1000 = vmatpush1.msra.mxu0 0.0
  %1001 = vmatprep.subr.mxu0 0.0
  %1002 = vmatpush1.msra.mxu0 0.0
  %1003 = vmatprep.subr.mxu0 0.0
  %1004 = vmatpush1.msra.mxu0 0.0
  %1005 = vmatprep.subr.mxu0 0.0
  %1006 = vmatpush1.msra.mxu0 0.0
  %1007 = vmatprep.subr.mxu0 0.0
  %1008 = vmatpush1.msra.mxu0 0.0
  %1009 = vmatprep.subr.mxu0 0.0
  %1010 = vmatpush1.msra.mxu0 0.0
  %1011 = vmatprep.mubr.f32.mxu0 0.0
  %1012 = vmatmul.mubr.f32.gmra.mrb[0].mxu0 %v724
  %v1013 = vpop.f32.mrb[0].mxu0
  %v1014 = vadd.f32 0.0, %v1013
  %v1015 = vpop.f32.mrb[0].mxu0
  %1016 = vdwg.mxu0
  %1017 = vst [vmem:[%s6 + $0x18] sm:$0xff] %v943
  %1018 = vst [vmem:[%s6 + $0x20] sm:$0xff] %v945
  %1019 = vst [vmem:[%s6 + $0x28] sm:$0xff] %v1014
  // Predicated region
  $region26: #{resblock_forward_nlc.4} parent=0 // pred_check
    _
  $region27: #{resblock_forward_nlc.4} parent=0 // pred_check_branch
    %1021 = sbr.rel (0) target = $region29
  $region28: #{resblock_forward_nlc.4} parent=0 // pred_region
    _
  $region29: #{resblock_forward_nlc.4} parent=0 // pred_fallthru
    _
  // Predicated region
  $region30: #{resblock_forward_nlc.4} parent=0 // pred_check
    _
  $region31: #{resblock_forward_nlc.4} parent=0 // pred_check_branch
    %1023 = sbr.rel (0) target = $region33
  $region32: #{resblock_forward_nlc.4} parent=0 // pred_region
    _
  $region33: #{resblock_forward_nlc.4} parent=0 // pred_fallthru
    _

// kernel: resblock_forward_nlc.5
$region0: #{resblock_forward_nlc.5}
  #allocation0 [shape = 'u32[]', space=smem, size = 0x4, offset = 0x4, fixed_abs, tag = 'smem constant byte address 0x4 - core index']
  #allocation1 [shape = 'u32[144,128]{1,0:T(1,128)}', space=vmem, size = 0x12000, scoped, tag = 'internal scratch']
  %s0 = inlined_call_operand.vmem [shape: f32[1,2], index: 0, kind: input, shape index: {}]
  %s1 = inlined_call_operand.vmem [shape: f32[16,12], index: 1, kind: input, shape index: {}]
  %s2 = inlined_call_operand.vmem [shape: f32[12,384], index: 2, kind: input, shape index: {}]
  %s3 = inlined_call_operand.vmem [shape: f32[12,384], index: 3, kind: input, shape index: {}]
  %s4 = inlined_call_operand.vmem [shape: f32[384,384], index: 4, kind: input, shape index: {}]
  %s5 = inlined_call_operand.vmem [shape: f32[1,384], index: 5, kind: input, shape index: {}]
  %s6 = inlined_call_operand.vmem [shape: f32[1,384], index: 6, kind: input, shape index: {}]
  %s7 = inlined_call_operand.vmem [shape: f32[1,384], index: 7, kind: input, shape index: {}]
  %s8 = inlined_call_operand.vmem [shape: f32[1,384], index: 8, kind: input, shape index: {}]
  %s9 = inlined_call_operand.hbm [shape: f32[16,8], index: 9, kind: output, shape index: {}]
  %s10 = sld [smem:[#allocation0]]
  $region46: #{resblock_forward_nlc.5} parent=0
    _
  %s12 = ssub.s32 1, %s10
  %s13 = scalar_select 0, %s12, %s10
  $region1: #{resblock_forward_nlc.5} parent=0
    #allocation2 [shape = 'u8[8192]{0}', space=vmem, size = 0x2000, scoped, tag = 'output window, operand 0, single buffered']
    #allocation3 [shape = 's32[1]{0}', space=sflag, size = 0x4, scoped, tag = 'scoped memory for resblock_forward_nlc.5']
    %14 = vsyncpa [#allocation3], 0
    // Predicated region
    $region2: #{resblock_forward_nlc.5} parent=1 // pred_check
      _
    $region3: #{resblock_forward_nlc.5} parent=1 // pred_check_branch
      %16 = sbr.rel (0) target = $region5
    $region4: #{resblock_forward_nlc.5} parent=1 // pred_region
      _
    $region5: #{resblock_forward_nlc.5} parent=1 // pred_fallthru
      _
    // Predicated region
    $region6: #{resblock_forward_nlc.5} parent=1 // pred_check
      _
    $region7: #{resblock_forward_nlc.5} parent=1 // pred_check_branch
      %18 = sbr.rel (0) target = $region9
    $region8: #{resblock_forward_nlc.5} parent=1 // pred_region
      _
    $region9: #{resblock_forward_nlc.5} parent=1 // pred_fallthru
      _
    // Predicated region
    $region10: #{resblock_forward_nlc.5} parent=1 // pred_check
      _
    $region11: #{resblock_forward_nlc.5} parent=1 // pred_check_branch
      %20 = sbr.rel (0) target = $region13
    $region12: #{resblock_forward_nlc.5} parent=1 // pred_region
      _
    $region13: #{resblock_forward_nlc.5} parent=1 // pred_fallthru
      _
    // Predicated region
    $region14: #{resblock_forward_nlc.5} parent=1 // pred_check
      _
    $region15: #{resblock_forward_nlc.5} parent=1 // pred_check_branch
      %22 = sbr.rel (0) target = $region17
    $region16: #{resblock_forward_nlc.5} parent=1 // pred_region
      _
    $region17: #{resblock_forward_nlc.5} parent=1 // pred_fallthru
      _
    // Predicated region
    $region18: #{resblock_forward_nlc.5} parent=1 // pred_check
      _
    $region19: #{resblock_forward_nlc.5} parent=1 // pred_check_branch
      %24 = sbr.rel (0) target = $region21
    $region20: #{resblock_forward_nlc.5} parent=1 // pred_region
      _
    $region21: #{resblock_forward_nlc.5} parent=1 // pred_fallthru
      _
    // Predicated region
    $region22: #{resblock_forward_nlc.5} parent=1 // pred_check
      _
    $region23: #{resblock_forward_nlc.5} parent=1 // pred_check_branch
      %26 = sbr.rel (0) target = $region25
    $region24: #{resblock_forward_nlc.5} parent=1 // pred_region
      _
    $region25: #{resblock_forward_nlc.5} parent=1 // pred_fallthru
      _
    // Predicated region
    $region26: #{resblock_forward_nlc.5} parent=1 // pred_check
      _
    $region27: #{resblock_forward_nlc.5} parent=1 // pred_check_branch
      %28 = sbr.rel (0) target = $region29
    $region28: #{resblock_forward_nlc.5} parent=1 // pred_region
      _
    $region29: #{resblock_forward_nlc.5} parent=1 // pred_fallthru
      _
    // Predicated region
    $region30: #{resblock_forward_nlc.5} parent=1 // pred_check
      _
    $region31: #{resblock_forward_nlc.5} parent=1 // pred_check_branch
      %30 = sbr.rel (0) target = $region33
    $region32: #{resblock_forward_nlc.5} parent=1 // pred_region
      _
    $region33: #{resblock_forward_nlc.5} parent=1 // pred_fallthru
      _
    // Predicated region
    $region34: #{resblock_forward_nlc.5} parent=1 // pred_check
      _
    $region35: #{resblock_forward_nlc.5} parent=1 // pred_check_branch
      %32 = sbr.rel (0) target = $region37
    $region36: #{resblock_forward_nlc.5} parent=1 // pred_region
      _
    $region37: #{resblock_forward_nlc.5} parent=1 // pred_fallthru
      _
    %v33 = vld [vmem:[%s0] sm:$0x1]
    %v34 = vld [vmem:[%s1] sm:$0xff]
    %v35 = vld [vmem:[%s1 + $0x8] sm:$0xff]
    %v36 = vld [vmem:[%s2] sm:$0xff]
    %v37 = vld [vmem:[%s2 + $0x8] sm:$0xff]
    %v38 = vld [vmem:[%s2 + $0x10] sm:$0xff]
    %v39 = vld [vmem:[%s2 + $0x18] sm:$0xf]
    %v40 = vld [vmem:[%s2 + $0x20] sm:$0xf]
    %v41 = vld [vmem:[%s2 + $0x28] sm:$0xf]
    %vm42 = vcmask 97280
    %v44 = vsel %vm42, %v34, 0
    %v47 = vsel %vm42, %v35, 0
    %vm49 = vcmask 1043456
    %v51 = vsel %vm49, %v39, 0
    %v54 = vsel %vm49, %v40, 0
    %v57 = vsel %vm49, %v41, 0
    %59 = vmatprep.subr.mxu0 %v37
    %60 = vmatpush1.msra.mxu0 %v36
    %61 = vmatprep.subr.mxu0 %v54
    %62 = vmatpush1.msra.mxu0 %v51
    %63 = vmatprep.subr.mxu0 0.0
    %64 = vmatpush1.msra.mxu0 0.0
    %65 = vmatprep.subr.mxu0 0.0
    %66 = vmatpush1.msra.mxu0 0.0
    %67 = vmatprep.subr.mxu0 0.0
    %68 = vmatpush1.msra.mxu0 0.0
    %69 = vmatprep.subr.mxu0 0.0
    %70 = vmatpush1.msra.mxu0 0.0
    %71 = vmatprep.subr.mxu0 0.0
    %72 = vmatpush1.msra.mxu0 0.0
    %73 = vmatprep.subr.mxu0 0.0
    %74 = vmatpush1.msra.mxu0 0.0
    %75 = vmatprep.subr.mxu0 0.0
    %76 = vmatpush1.msra.mxu0 0.0
    %77 = vmatprep.subr.mxu0 0.0
    %78 = vmatpush1.msra.mxu0 0.0
    %79 = vmatprep.subr.mxu0 0.0
    %80 = vmatpush1.msra.mxu0 0.0
    %81 = vmatprep.subr.mxu0 0.0
    %82 = vmatpush1.msra.mxu0 0.0
    %83 = vmatprep.subr.mxu0 0.0
    %84 = vmatpush1.msra.mxu0 0.0
    %85 = vmatprep.subr.mxu0 0.0
    %86 = vmatpush1.msra.mxu0 0.0
    %87 = vmatprep.subr.mxu0 0.0
    %88 = vmatpush1.msra.mxu0 0.0
    %89 = vmatprep.subr.mxu0 0.0
    %90 = vmatpush1.msra.mxu0 0.0
    %91 = vmatprep.subr.mxu0 0.0
    %92 = vmatpush1.msra.mxu0 0.0
    %93 = vmatprep.subr.mxu0 0.0
    %94 = vmatpush1.msra.mxu0 0.0
    %95 = vmatprep.subr.mxu0 0.0
    %96 = vmatpush1.msra.mxu0 0.0
    %97 = vmatprep.subr.mxu0 0.0
    %98 = vmatpush1.msra.mxu0 0.0
    %99 = vmatprep.subr.mxu0 0.0
    %100 = vmatpush1.msra.mxu0 0.0
    %101 = vmatprep.subr.mxu0 0.0
    %102 = vmatpush1.msra.mxu0 0.0
    %103 = vmatprep.subr.mxu0 0.0
    %104 = vmatpush1.msra.mxu0 0.0
    %105 = vmatprep.subr.mxu0 0.0
    %106 = vmatpush1.msra.mxu0 0.0
    %107 = vmatprep.subr.mxu0 0.0
    %108 = vmatpush1.msra.mxu0 0.0
    %109 = vmatprep.subr.mxu0 0.0
    %110 = vmatpush1.msra.mxu0 0.0
    %111 = vmatprep.subr.mxu0 0.0
    %112 = vmatpush1.msra.mxu0 0.0
    %113 = vmatprep.subr.mxu0 0.0
    %114 = vmatpush1.msra.mxu0 0.0
    %115 = vmatprep.subr.mxu0 0.0
    %116 = vmatpush1.msra.mxu0 0.0
    %117 = vmatprep.subr.mxu0 0.0
    %118 = vmatpush1.msra.mxu0 0.0
    %119 = vmatprep.subr.mxu0 0.0
    %120 = vmatpush1.msra.mxu0 0.0
    %121 = vmatprep.subr.mxu0 0.0
    %122 = vmatpush1.msra.mxu0 0.0
    %123 = vmatprep.mubr.f32.mxu0 0.0
    %124 = vmatmul.mubr.f32.gmra.mrb[0].mxu0 %v44
    %v125 = vpop.f32.mrb[0].mxu0
    %v126 = vadd.f32 0.0, %v125
    %v127 = vpop.f32.mrb[0].mxu0
    %v128 = vadd.f32 0.0, %v127
    %129 = vmatprep.mubr.f32.mxu0 0.0
    %130 = vmatmul.mubr.f32.gmra.mrb[0].mxu0 %v47
    %v131 = vpop.f32.mrb[0].mxu0
    %v132 = vadd.f32 0.0, %v131
    %v133 = vpop.f32.mrb[0].mxu0
    %v134 = vadd.f32 0.0, %v133
    %135 = vdwg.mxu0
    %136 = vmatprep.subr.mxu0 0.0
    %137 = vmatpush1.msra.mxu0 %v38
    %138 = vmatprep.subr.mxu0 0.0
    %139 = vmatpush1.msra.mxu0 %v57
    %140 = vmatprep.subr.mxu0 0.0
    %141 = vmatpush1.msra.mxu0 0.0
    %142 = vmatprep.subr.mxu0 0.0
    %143 = vmatpush1.msra.mxu0 0.0
    %144 = vmatprep.subr.mxu0 0.0
    %145 = vmatpush1.msra.mxu0 0.0
    %146 = vmatprep.subr.mxu0 0.0
    %147 = vmatpush1.msra.mxu0 0.0
    %148 = vmatprep.subr.mxu0 0.0
    %149 = vmatpush1.msra.mxu0 0.0
    %150 = vmatprep.subr.mxu0 0.0
    %151 = vmatpush1.msra.mxu0 0.0
    %152 = vmatprep.subr.mxu0 0.0
    %153 = vmatpush1.msra.mxu0 0.0
    %154 = vmatprep.subr.mxu0 0.0
    %155 = vmatpush1.msra.mxu0 0.0
    %156 = vmatprep.subr.mxu0 0.0
    %157 = vmatpush1.msra.mxu0 0.0
    %158 = vmatprep.subr.mxu0 0.0
    %159 = vmatpush1.msra.mxu0 0.0
    %160 = vmatprep.subr.mxu0 0.0
    %161 = vmatpush1.msra.mxu0 0.0
    %162 = vmatprep.subr.mxu0 0.0
    %163 = vmatpush1.msra.mxu0 0.0
    %164 = vmatprep.subr.mxu0 0.0
    %165 = vmatpush1.msra.mxu0 0.0
    %166 = vmatprep.subr.mxu0 0.0
    %167 = vmatpush1.msra.mxu0 0.0
    %168 = vmatprep.subr.mxu0 0.0
    %169 = vmatpush1.msra.mxu0 0.0
    %170 = vmatprep.subr.mxu0 0.0
    %171 = vmatpush1.msra.mxu0 0.0
    %172 = vmatprep.subr.mxu0 0.0
    %173 = vmatpush1.msra.mxu0 0.0
    %174 = vmatprep.subr.mxu0 0.0
    %175 = vmatpush1.msra.mxu0 0.0
    %176 = vmatprep.subr.mxu0 0.0
    %177 = vmatpush1.msra.mxu0 0.0
    %178 = vmatprep.subr.mxu0 0.0
    %179 = vmatpush1.msra.mxu0 0.0
    %180 = vmatprep.subr.mxu0 0.0
    %181 = vmatpush1.msra.mxu0 0.0
    %182 = vmatprep.subr.mxu0 0.0
    %183 = vmatpush1.msra.mxu0 0.0
    %184 = vmatprep.subr.mxu0 0.0
    %185 = vmatpush1.msra.mxu0 0.0
    %186 = vmatprep.subr.mxu0 0.0
    %187 = vmatpush1.msra.mxu0 0.0
    %188 = vmatprep.subr.mxu0 0.0
    %189 = vmatpush1.msra.mxu0 0.0
    %190 = vmatprep.subr.mxu0 0.0
    %191 = vmatpush1.msra.mxu0 0.0
    %192 = vmatprep.subr.mxu0 0.0
    %193 = vmatpush1.msra.mxu0 0.0
    %194 = vmatprep.subr.mxu0 0.0
    %195 = vmatpush1.msra.mxu0 0.0
    %196 = vmatprep.subr.mxu0 0.0
    %197 = vmatpush1.msra.mxu0 0.0
    %198 = vmatprep.subr.mxu0 0.0
    %199 = vmatpush1.msra.mxu0 0.0
    %200 = vmatprep.mubr.f32.mxu0 0.0
    %201 = vmatmul.mubr.f32.gmra.mrb[0].mxu0 %v44
    %v202 = vpop.f32.mrb[0].mxu0
    %v203 = vadd.f32 0.0, %v202
    %v204 = vpop.f32.mrb[0].mxu0
    %205 = vmatprep.mubr.f32.mxu0 0.0
    %206 = vmatmul.mubr.f32.gmra.mrb[0].mxu0 %v47
    %v207 = vpop.f32.mrb[0].mxu0
    %v208 = vadd.f32 0.0, %v207
    %v209 = vpop.f32.mrb[0].mxu0
    %210 = vdwg.mxu0
    %v211 = vld [vmem:[%s5] sm:$0x7]
    %v213 = vlaneseq
    %v214 = vshrl.u32 %v213, 7
    %v215 = vsub.s32 0, %v214
    %v216 = vrot.slane %v211, %v215
    %v217 = vlaneseq
    %v218 = vshrl.u32 %v217, 7
    %v219 = vsub.s32 1, %v218
    %v220 = vrot.slane %v211, %v219
    %v221 = vlaneseq
    %v222 = vshrl.u32 %v221, 7
    %v223 = vsub.s32 2, %v222
    %v224 = vrot.slane %v211, %v223
    %v228 = vmul.f32 %v126, %v216
    %v229 = vmul.f32 %v128, %v220
    %v230 = vmul.f32 %v203, %v224
    %v231 = vmul.f32 %v132, %v216
    %v232 = vmul.f32 %v134, %v220
    %v233 = vmul.f32 %v208, %v224
    %v234 = vld [vmem:[%s6] sm:$0x7]
    %v236 = vlaneseq
    %v237 = vshrl.u32 %v236, 7
    %v238 = vsub.s32 0, %v237
    %v239 = vrot.slane %v234, %v238
    %v240 = vlaneseq
    %v241 = vshrl.u32 %v240, 7
    %v242 = vsub.s32 1, %v241
    %v243 = vrot.slane %v234, %v242
    %v244 = vlaneseq
    %v245 = vshrl.u32 %v244, 7
    %v246 = vsub.s32 2, %v245
    %v247 = vrot.slane %v234, %v246
    %v251 = vadd.f32 %v228, %v239
    %v252 = vadd.f32 %v229, %v243
    %v253 = vadd.f32 %v230, %v247
    %v254 = vadd.f32 %v231, %v239
    %v255 = vadd.f32 %v232, %v243
    %v256 = vadd.f32 %v233, %v247
    %vm257 = vcmp.ge.f32.partialorder %v251, 0.0
    %vm258 = vcmp.ge.f32.partialorder %v252, 0.0
    %vm259 = vcmp.ge.f32.partialorder %v253, 0.0
    %vm260 = vcmp.ge.f32.partialorder %v254, 0.0
    %vm261 = vcmp.ge.f32.partialorder %v255, 0.0
    %vm262 = vcmp.ge.f32.partialorder %v256, 0.0
    %v264 = vlaneseq
    %v265 = vshrl.u32 %v264, 7
    %v266 = vsub.s32 0, %v265
    %v267 = vrot.slane %v33, %v266
    %268 = vset.pattern.permute.xlu0 0
    %269 = vperm.xlu0 %268, %v267
    %v270 = vpop.permute.xlu0 %269
    %v272 = vmul.f32 %v270, %v251
    %v273 = vmul.f32 %v270, %v252
    %v274 = vmul.f32 %v270, %v253
    %v275 = vmul.f32 %v270, %v254
    %v276 = vmul.f32 %v270, %v255
    %v277 = vmul.f32 %v270, %v256
    %v278 = vsel %vm257, %v251, %v272
    %v279 = vsel %vm258, %v252, %v273
    %v280 = vsel %vm259, %v253, %v274
    %v281 = vsel %vm260, %v254, %v275
    %v282 = vsel %vm261, %v255, %v276
    %v283 = vsel %vm262, %v256, %v277
    %v284 = vld [vmem:[%s4] sm:$0xff]
    %v285 = vld [vmem:[%s4 + $0x8] sm:$0xff]
    %v286 = vld [vmem:[%s4 + $0x10] sm:$0xff]
    %v287 = vld [vmem:[%s4 + $0x18] sm:$0xff]
    %v288 = vld [vmem:[%s4 + $0x20] sm:$0xff]
    %v289 = vld [vmem:[%s4 + $0x28] sm:$0xff]
    %v290 = vld [vmem:[%s4 + $0x30] sm:$0xff]
    %v291 = vld [vmem:[%s4 + $0x38] sm:$0xff]
    %v292 = vld [vmem:[%s4 + $0x40] sm:$0xff]
    %v293 = vld [vmem:[%s4 + $0x48] sm:$0xff]
    %v294 = vld [vmem:[%s4 + $0x50] sm:$0xff]
    %v295 = vld [vmem:[%s4 + $0x58] sm:$0xff]
    %v296 = vld [vmem:[%s4 + $0x60] sm:$0xff]
    %v297 = vld [vmem:[%s4 + $0x68] sm:$0xff]
    %v298 = vld [vmem:[%s4 + $0x70] sm:$0xff]
    %v299 = vld [vmem:[%s4 + $0x78] sm:$0xff]
    %v300 = vld [vmem:[%s4 + $0x80] sm:$0xff]
    %v301 = vld [vmem:[%s4 + $0x88] sm:$0xff]
    %v302 = vld [vmem:[%s4 + $0x90] sm:$0xff]
    %v303 = vld [vmem:[%s4 + $0x98] sm:$0xff]
    %v304 = vld [vmem:[%s4 + $0xa0] sm:$0xff]
    %v305 = vld [vmem:[%s4 + $0xa8] sm:$0xff]
    %v306 = vld [vmem:[%s4 + $0xb0] sm:$0xff]
    %v307 = vld [vmem:[%s4 + $0xb8] sm:$0xff]
    %v308 = vld [vmem:[%s4 + $0xc0] sm:$0xff]
    %v309 = vld [vmem:[%s4 + $0xc8] sm:$0xff]
    %v310 = vld [vmem:[%s4 + $0xd0] sm:$0xff]
    %v311 = vld [vmem:[%s4 + $0xd8] sm:$0xff]
    %v312 = vld [vmem:[%s4 + $0xe0] sm:$0xff]
    %v313 = vld [vmem:[%s4 + $0xe8] sm:$0xff]
    %v314 = vld [vmem:[%s4 + $0xf0] sm:$0xff]
    %v315 = vld [vmem:[%s4 + $0xf8] sm:$0xff]
    %v316 = vld [vmem:[%s4 + $0x100] sm:$0xff]
    %v317 = vld [vmem:[%s4 + $0x108] sm:$0xff]
    %v318 = vld [vmem:[%s4 + $0x110] sm:$0xff]
    %v319 = vld [vmem:[%s4 + $0x118] sm:$0xff]
    %v320 = vld [vmem:[%s4 + $0x120] sm:$0xff]
    %v321 = vld [vmem:[%s4 + $0x128] sm:$0xff]
    %v322 = vld [vmem:[%s4 + $0x130] sm:$0xff]
    %v323 = vld [vmem:[%s4 + $0x138] sm:$0xff]
    %v324 = vld [vmem:[%s4 + $0x140] sm:$0xff]
    %v325 = vld [vmem:[%s4 + $0x148] sm:$0xff]
    %v326 = vld [vmem:[%s4 + $0x150] sm:$0xff]
    %v327 = vld [vmem:[%s4 + $0x158] sm:$0xff]
    %v328 = vld [vmem:[%s4 + $0x160] sm:$0xff]
    %v329 = vld [vmem:[%s4 + $0x168] sm:$0xff]
    %v330 = vld [vmem:[%s4 + $0x170] sm:$0xff]
    %v331 = vld [vmem:[%s4 + $0x178] sm:$0xff]
    %v332 = vld [vmem:[%s4 + $0x180] sm:$0xff]
    %v333 = vld [vmem:[%s4 + $0x188] sm:$0xff]
    %v334 = vld [vmem:[%s4 + $0x190] sm:$0xff]
    %v335 = vld [vmem:[%s4 + $0x198] sm:$0xff]
    %v336 = vld [vmem:[%s4 + $0x1a0] sm:$0xff]
    %v337 = vld [vmem:[%s4 + $0x1a8] sm:$0xff]
    %v338 = vld [vmem:[%s4 + $0x1b0] sm:$0xff]
    %v339 = vld [vmem:[%s4 + $0x1b8] sm:$0xff]
    %v340 = vld [vmem:[%s4 + $0x1c0] sm:$0xff]
    %v341 = vld [vmem:[%s4 + $0x1c8] sm:$0xff]
    %v342 = vld [vmem:[%s4 + $0x1d0] sm:$0xff]
    %v343 = vld [vmem:[%s4 + $0x1d8] sm:$0xff]
    %v344 = vld [vmem:[%s4 + $0x1e0] sm:$0xff]
    %v345 = vld [vmem:[%s4 + $0x1e8] sm:$0xff]
    %v346 = vld [vmem:[%s4 + $0x1f0] sm:$0xff]
    %v347 = vld [vmem:[%s4 + $0x1f8] sm:$0xff]
    %v348 = vld [vmem:[%s4 + $0x200] sm:$0xff]
    %v349 = vld [vmem:[%s4 + $0x208] sm:$0xff]
    %v350 = vld [vmem:[%s4 + $0x210] sm:$0xff]
    %v351 = vld [vmem:[%s4 + $0x218] sm:$0xff]
    %v352 = vld [vmem:[%s4 + $0x220] sm:$0xff]
    %v353 = vld [vmem:[%s4 + $0x228] sm:$0xff]
    %v354 = vld [vmem:[%s4 + $0x230] sm:$0xff]
    %v355 = vld [vmem:[%s4 + $0x238] sm:$0xff]
    %v356 = vld [vmem:[%s4 + $0x240] sm:$0xff]
    %v357 = vld [vmem:[%s4 + $0x248] sm:$0xff]
    %v358 = vld [vmem:[%s4 + $0x250] sm:$0xff]
    %v359 = vld [vmem:[%s4 + $0x258] sm:$0xff]
    %v360 = vld [vmem:[%s4 + $0x260] sm:$0xff]
    %v361 = vld [vmem:[%s4 + $0x268] sm:$0xff]
    %v362 = vld [vmem:[%s4 + $0x270] sm:$0xff]
    %v363 = vld [vmem:[%s4 + $0x278] sm:$0xff]
    %v364 = vld [vmem:[%s4 + $0x280] sm:$0xff]
    %v365 = vld [vmem:[%s4 + $0x288] sm:$0xff]
    %v366 = vld [vmem:[%s4 + $0x290] sm:$0xff]
    %v367 = vld [vmem:[%s4 + $0x298] sm:$0xff]
    %v368 = vld [vmem:[%s4 + $0x2a0] sm:$0xff]
    %v369 = vld [vmem:[%s4 + $0x2a8] sm:$0xff]
    %v370 = vld [vmem:[%s4 + $0x2b0] sm:$0xff]
    %v371 = vld [vmem:[%s4 + $0x2b8] sm:$0xff]
    %v372 = vld [vmem:[%s4 + $0x2c0] sm:$0xff]
    %v373 = vld [vmem:[%s4 + $0x2c8] sm:$0xff]
    %v374 = vld [vmem:[%s4 + $0x2d0] sm:$0xff]
    %v375 = vld [vmem:[%s4 + $0x2d8] sm:$0xff]
    %v376 = vld [vmem:[%s4 + $0x2e0] sm:$0xff]
    %v377 = vld [vmem:[%s4 + $0x2e8] sm:$0xff]
    %v378 = vld [vmem:[%s4 + $0x2f0] sm:$0xff]
    %v379 = vld [vmem:[%s4 + $0x2f8] sm:$0xff]
    %v380 = vld [vmem:[%s4 + $0x300] sm:$0xff]
    %v381 = vld [vmem:[%s4 + $0x308] sm:$0xff]
    %v382 = vld [vmem:[%s4 + $0x310] sm:$0xff]
    %v383 = vld [vmem:[%s4 + $0x318] sm:$0xff]
    %v384 = vld [vmem:[%s4 + $0x320] sm:$0xff]
    %v385 = vld [vmem:[%s4 + $0x328] sm:$0xff]
    %v386 = vld [vmem:[%s4 + $0x330] sm:$0xff]
    %v387 = vld [vmem:[%s4 + $0x338] sm:$0xff]
    %v388 = vld [vmem:[%s4 + $0x340] sm:$0xff]
    %v389 = vld [vmem:[%s4 + $0x348] sm:$0xff]
    %v390 = vld [vmem:[%s4 + $0x350] sm:$0xff]
    %v391 = vld [vmem:[%s4 + $0x358] sm:$0xff]
    %v392 = vld [vmem:[%s4 + $0x360] sm:$0xff]
    %v393 = vld [vmem:[%s4 + $0x368] sm:$0xff]
    %v394 = vld [vmem:[%s4 + $0x370] sm:$0xff]
    %v395 = vld [vmem:[%s4 + $0x378] sm:$0xff]
    %v396 = vld [vmem:[%s4 + $0x380] sm:$0xff]
    %v397 = vld [vmem:[%s4 + $0x388] sm:$0xff]
    %v398 = vld [vmem:[%s4 + $0x390] sm:$0xff]
    %v399 = vld [vmem:[%s4 + $0x398] sm:$0xff]
    %v400 = vld [vmem:[%s4 + $0x3a0] sm:$0xff]
    %v401 = vld [vmem:[%s4 + $0x3a8] sm:$0xff]
    %v402 = vld [vmem:[%s4 + $0x3b0] sm:$0xff]
    %v403 = vld [vmem:[%s4 + $0x3b8] sm:$0xff]
    %v404 = vld [vmem:[%s4 + $0x3c0] sm:$0xff]
    %v405 = vld [vmem:[%s4 + $0x3c8] sm:$0xff]
    %v406 = vld [vmem:[%s4 + $0x3d0] sm:$0xff]
    %v407 = vld [vmem:[%s4 + $0x3d8] sm:$0xff]
    %v408 = vld [vmem:[%s4 + $0x3e0] sm:$0xff]
    %v409 = vld [vmem:[%s4 + $0x3e8] sm:$0xff]
    %v410 = vld [vmem:[%s4 + $0x3f0] sm:$0xff]
    %v411 = vld [vmem:[%s4 + $0x3f8] sm:$0xff]
    %v412 = vld [vmem:[%s4 + $0x400] sm:$0xff]
    %v413 = vld [vmem:[%s4 + $0x408] sm:$0xff]
    %v414 = vld [vmem:[%s4 + $0x410] sm:$0xff]
    %v415 = vld [vmem:[%s4 + $0x418] sm:$0xff]
    %v416 = vld [vmem:[%s4 + $0x420] sm:$0xff]
    %v417 = vld [vmem:[%s4 + $0x428] sm:$0xff]
    %v418 = vld [vmem:[%s4 + $0x430] sm:$0xff]
    %v419 = vld [vmem:[%s4 + $0x438] sm:$0xff]
    %v420 = vld [vmem:[%s4 + $0x440] sm:$0xff]
    %v421 = vld [vmem:[%s4 + $0x448] sm:$0xff]
    %v422 = vld [vmem:[%s4 + $0x450] sm:$0xff]
    %v423 = vld [vmem:[%s4 + $0x458] sm:$0xff]
    %v424 = vld [vmem:[%s4 + $0x460] sm:$0xff]
    %v425 = vld [vmem:[%s4 + $0x468] sm:$0xff]
    %v426 = vld [vmem:[%s4 + $0x470] sm:$0xff]
    %v427 = vld [vmem:[%s4 + $0x478] sm:$0xff]
    %428 = vmatprep.subr.mxu0 %v285
    %429 = vmatpush1.msra.mxu0 %v284
    %430 = vmatprep.subr.mxu0 %v288
    %431 = vmatpush1.msra.mxu0 %v287
    %432 = vmatprep.subr.mxu0 %v291
    %433 = vmatpush1.msra.mxu0 %v290
    %434 = vmatprep.subr.mxu0 %v294
    %435 = vmatpush1.msra.mxu0 %v293
    %436 = vmatprep.subr.mxu0 %v297
    %437 = vmatpush1.msra.mxu0 %v296
    %438 = vmatprep.subr.mxu0 %v300
    %439 = vmatpush1.msra.mxu0 %v299
    %440 = vmatprep.subr.mxu0 %v303
    %441 = vmatpush1.msra.mxu0 %v302
    %442 = vmatprep.subr.mxu0 %v306
    %443 = vmatpush1.msra.mxu0 %v305
    %444 = vmatprep.subr.mxu0 %v309
    %445 = vmatpush1.msra.mxu0 %v308
    %446 = vmatprep.subr.mxu0 %v312
    %447 = vmatpush1.msra.mxu0 %v311
    %448 = vmatprep.subr.mxu0 %v315
    %449 = vmatpush1.msra.mxu0 %v314
    %450 = vmatprep.subr.mxu0 %v318
    %451 = vmatpush1.msra.mxu0 %v317
    %452 = vmatprep.subr.mxu0 %v321
    %453 = vmatpush1.msra.mxu0 %v320
    %454 = vmatprep.subr.mxu0 %v324
    %455 = vmatpush1.msra.mxu0 %v323
    %456 = vmatprep.subr.mxu0 %v327
    %457 = vmatpush1.msra.mxu0 %v326
    %458 = vmatprep.subr.mxu0 %v330
    %459 = vmatpush1.msra.mxu0 %v329
    %460 = vmatprep.subr.mxu0 %v333
    %461 = vmatpush1.msra.mxu0 %v332
    %462 = vmatprep.subr.mxu0 %v336
    %463 = vmatpush1.msra.mxu0 %v335
    %464 = vmatprep.subr.mxu0 %v339
    %465 = vmatpush1.msra.mxu0 %v338
    %466 = vmatprep.subr.mxu0 %v342
    %467 = vmatpush1.msra.mxu0 %v341
    %468 = vmatprep.subr.mxu0 %v345
    %469 = vmatpush1.msra.mxu0 %v344
    %470 = vmatprep.subr.mxu0 %v348
    %471 = vmatpush1.msra.mxu0 %v347
    %472 = vmatprep.subr.mxu0 %v351
    %473 = vmatpush1.msra.mxu0 %v350
    %474 = vmatprep.subr.mxu0 %v354
    %475 = vmatpush1.msra.mxu0 %v353
    %476 = vmatprep.subr.mxu0 %v357
    %477 = vmatpush1.msra.mxu0 %v356
    %478 = vmatprep.subr.mxu0 %v360
    %479 = vmatpush1.msra.mxu0 %v359
    %480 = vmatprep.subr.mxu0 %v363
    %481 = vmatpush1.msra.mxu0 %v362
    %482 = vmatprep.subr.mxu0 %v366
    %483 = vmatpush1.msra.mxu0 %v365
    %484 = vmatprep.subr.mxu0 %v369
    %485 = vmatpush1.msra.mxu0 %v368
    %486 = vmatprep.subr.mxu0 %v372
    %487 = vmatpush1.msra.mxu0 %v371
    %488 = vmatprep.subr.mxu0 %v375
    %489 = vmatpush1.msra.mxu0 %v374
    %490 = vmatprep.subr.mxu0 %v378
    %491 = vmatpush1.msra.mxu0 %v377
    %492 = vmatprep.mubr.f32.mxu0 %v279
    %493 = vmatmul.mubr.f32.gmra.mrb[0].mxu0 %v278
    %v494 = vpop.f32.mrb[0].mxu0
    %v495 = vadd.f32 0.0, %v494
    %v496 = vpop.f32.mrb[0].mxu0
    %v497 = vadd.f32 0.0, %v496
    %498 = vmatprep.mubr.f32.mxu0 %v282
    %499 = vmatmul.mubr.f32.gmra.mrb[0].mxu0 %v281
    %v500 = vpop.f32.mrb[0].mxu0
    %v501 = vadd.f32 0.0, %v500
    %v502 = vpop.f32.mrb[0].mxu0
    %v503 = vadd.f32 0.0, %v502
    %504 = vdwg.mxu0
    %505 = vmatprep.subr.mxu0 %v381
    %506 = vmatpush1.msra.mxu0 %v380
    %507 = vmatprep.subr.mxu0 %v384
    %508 = vmatpush1.msra.mxu0 %v383
    %509 = vmatprep.subr.mxu0 %v387
    %510 = vmatpush1.msra.mxu0 %v386
    %511 = vmatprep.subr.mxu0 %v390
    %512 = vmatpush1.msra.mxu0 %v389
    %513 = vmatprep.subr.mxu0 %v393
    %514 = vmatpush1.msra.mxu0 %v392
    %515 = vmatprep.subr.mxu0 %v396
    %516 = vmatpush1.msra.mxu0 %v395
    %517 = vmatprep.subr.mxu0 %v399
    %518 = vmatpush1.msra.mxu0 %v398
    %519 = vmatprep.subr.mxu0 %v402
    %520 = vmatpush1.msra.mxu0 %v401
    %521 = vmatprep.subr.mxu0 %v405
    %522 = vmatpush1.msra.mxu0 %v404
    %523 = vmatprep.subr.mxu0 %v408
    %524 = vmatpush1.msra.mxu0 %v407
    %525 = vmatprep.subr.mxu0 %v411
    %526 = vmatpush1.msra.mxu0 %v410
    %527 = vmatprep.subr.mxu0 %v414
    %528 = vmatpush1.msra.mxu0 %v413
    %529 = vmatprep.subr.mxu0 %v417
    %530 = vmatpush1.msra.mxu0 %v416
    %531 = vmatprep.subr.mxu0 %v420
    %532 = vmatpush1.msra.mxu0 %v419
    %533 = vmatprep.subr.mxu0 %v423
    %534 = vmatpush1.msra.mxu0 %v422
    %535 = vmatprep.subr.mxu0 %v426
    %536 = vmatpush1.msra.mxu0 %v425
    %537 = vmatprep.subr.mxu0 0.0
    %538 = vmatpush1.msra.mxu0 0.0
    %539 = vmatprep.subr.mxu0 0.0
    %540 = vmatpush1.msra.mxu0 0.0
    %541 = vmatprep.subr.mxu0 0.0
    %542 = vmatpush1.msra.mxu0 0.0
    %543 = vmatprep.subr.mxu0 0.0
    %544 = vmatpush1.msra.mxu0 0.0
    %545 = vmatprep.subr.mxu0 0.0
    %546 = vmatpush1.msra.mxu0 0.0
    %547 = vmatprep.subr.mxu0 0.0
    %548 = vmatpush1.msra.mxu0 0.0
    %549 = vmatprep.subr.mxu0 0.0
    %550 = vmatpush1.msra.mxu0 0.0
    %551 = vmatprep.subr.mxu0 0.0
    %552 = vmatpush1.msra.mxu0 0.0
    %553 = vmatprep.subr.mxu0 0.0
    %554 = vmatpush1.msra.mxu0 0.0
    %555 = vmatprep.subr.mxu0 0.0
    %556 = vmatpush1.msra.mxu0 0.0
    %557 = vmatprep.subr.mxu0 0.0
    %558 = vmatpush1.msra.mxu0 0.0
    %559 = vmatprep.subr.mxu0 0.0
    %560 = vmatpush1.msra.mxu0 0.0
    %561 = vmatprep.subr.mxu0 0.0
    %562 = vmatpush1.msra.mxu0 0.0
    %563 = vmatprep.subr.mxu0 0.0
    %564 = vmatpush1.msra.mxu0 0.0
    %565 = vmatprep.subr.mxu0 0.0
    %566 = vmatpush1.msra.mxu0 0.0
    %567 = vmatprep.subr.mxu0 0.0
    %568 = vmatpush1.msra.mxu0 0.0
    %569 = vmatprep.mubr.f32.mxu0 0.0
    %570 = vmatmul.mubr.f32.gmra.mrb[0].mxu0 %v280
    %v571 = vpop.f32.mrb[0].mxu0
    %v572 = vadd.f32 %v495, %v571
    %v573 = vpop.f32.mrb[0].mxu0
    %v574 = vadd.f32 %v497, %v573
    %575 = vmatprep.mubr.f32.mxu0 0.0
    %576 = vmatmul.mubr.f32.gmra.mrb[0].mxu0 %v283
    %v577 = vpop.f32.mrb[0].mxu0
    %v578 = vadd.f32 %v501, %v577
    %v579 = vpop.f32.mrb[0].mxu0
    %v580 = vadd.f32 %v503, %v579
    %581 = vdwg.mxu0
    %582 = vmatprep.subr.mxu0 0.0
    %583 = vmatpush1.msra.mxu0 %v286
    %584 = vmatprep.subr.mxu0 0.0
    %585 = vmatpush1.msra.mxu0 %v289
    %586 = vmatprep.subr.mxu0 0.0
    %587 = vmatpush1.msra.mxu0 %v292
    %588 = vmatprep.subr.mxu0 0.0
    %589 = vmatpush1.msra.mxu0 %v295
    %590 = vmatprep.subr.mxu0 0.0
    %591 = vmatpush1.msra.mxu0 %v298
    %592 = vmatprep.subr.mxu0 0.0
    %593 = vmatpush1.msra.mxu0 %v301
    %594 = vmatprep.subr.mxu0 0.0
    %595 = vmatpush1.msra.mxu0 %v304
    %596 = vmatprep.subr.mxu0 0.0
    %597 = vmatpush1.msra.mxu0 %v307
    %598 = vmatprep.subr.mxu0 0.0
    %599 = vmatpush1.msra.mxu0 %v310
    %600 = vmatprep.subr.mxu0 0.0
    %601 = vmatpush1.msra.mxu0 %v313
    %602 = vmatprep.subr.mxu0 0.0
    %603 = vmatpush1.msra.mxu0 %v316
    %604 = vmatprep.subr.mxu0 0.0
    %605 = vmatpush1.msra.mxu0 %v319
    %606 = vmatprep.subr.mxu0 0.0
    %607 = vmatpush1.msra.mxu0 %v322
    %608 = vmatprep.subr.mxu0 0.0
    %609 = vmatpush1.msra.mxu0 %v325
    %610 = vmatprep.subr.mxu0 0.0
    %611 = vmatpush1.msra.mxu0 %v328
    %612 = vmatprep.subr.mxu0 0.0
    %613 = vmatpush1.msra.mxu0 %v331
    %614 = vmatprep.subr.mxu0 0.0
    %615 = vmatpush1.msra.mxu0 %v334
    %616 = vmatprep.subr.mxu0 0.0
    %617 = vmatpush1.msra.mxu0 %v337
    %618 = vmatprep.subr.mxu0 0.0
    %619 = vmatpush1.msra.mxu0 %v340
    %620 = vmatprep.subr.mxu0 0.0
    %621 = vmatpush1.msra.mxu0 %v343
    %622 = vmatprep.subr.mxu0 0.0
    %623 = vmatpush1.msra.mxu0 %v346
    %624 = vmatprep.subr.mxu0 0.0
    %625 = vmatpush1.msra.mxu0 %v349
    %626 = vmatprep.subr.mxu0 0.0
    %627 = vmatpush1.msra.mxu0 %v352
    %628 = vmatprep.subr.mxu0 0.0
    %629 = vmatpush1.msra.mxu0 %v355
    %630 = vmatprep.subr.mxu0 0.0
    %631 = vmatpush1.msra.mxu0 %v358
    %632 = vmatprep.subr.mxu0 0.0
    %633 = vmatpush1.msra.mxu0 %v361
    %634 = vmatprep.subr.mxu0 0.0
    %635 = vmatpush1.msra.mxu0 %v364
    %636 = vmatprep.subr.mxu0 0.0
    %637 = vmatpush1.msra.mxu0 %v367
    %638 = vmatprep.subr.mxu0 0.0
    %639 = vmatpush1.msra.mxu0 %v370
    %640 = vmatprep.subr.mxu0 0.0
    %641 = vmatpush1.msra.mxu0 %v373
    %642 = vmatprep.subr.mxu0 0.0
    %643 = vmatpush1.msra.mxu0 %v376
    %644 = vmatprep.subr.mxu0 0.0
    %645 = vmatpush1.msra.mxu0 %v379
    %646 = vmatprep.mubr.f32.mxu0 %v279
    %647 = vmatmul.mubr.f32.gmra.mrb[0].mxu0 %v278
    %v648 = vpop.f32.mrb[0].mxu0
    %v649 = vadd.f32 0.0, %v648
    %v650 = vpop.f32.mrb[0].mxu0
    %651 = vmatprep.mubr.f32.mxu0 %v282
    %652 = vmatmul.mubr.f32.gmra.mrb[0].mxu0 %v281
    %v653 = vpop.f32.mrb[0].mxu0
    %v654 = vadd.f32 0.0, %v653
    %v655 = vpop.f32.mrb[0].mxu0
    %656 = vdwg.mxu0
    %657 = vmatprep.subr.mxu0 0.0
    %658 = vmatpush1.msra.mxu0 %v382
    %659 = vmatprep.subr.mxu0 0.0
    %660 = vmatpush1.msra.mxu0 %v385
    %661 = vmatprep.subr.mxu0 0.0
    %662 = vmatpush1.msra.mxu0 %v388
    %663 = vmatprep.subr.mxu0 0.0
    %664 = vmatpush1.msra.mxu0 %v391
    %665 = vmatprep.subr.mxu0 0.0
    %666 = vmatpush1.msra.mxu0 %v394
    %667 = vmatprep.subr.mxu0 0.0
    %668 = vmatpush1.msra.mxu0 %v397
    %669 = vmatprep.subr.mxu0 0.0
    %670 = vmatpush1.msra.mxu0 %v400
    %671 = vmatprep.subr.mxu0 0.0
    %672 = vmatpush1.msra.mxu0 %v403
    %673 = vmatprep.subr.mxu0 0.0
    %674 = vmatpush1.msra.mxu0 %v406
    %675 = vmatprep.subr.mxu0 0.0
    %676 = vmatpush1.msra.mxu0 %v409
    %677 = vmatprep.subr.mxu0 0.0
    %678 = vmatpush1.msra.mxu0 %v412
    %679 = vmatprep.subr.mxu0 0.0
    %680 = vmatpush1.msra.mxu0 %v415
    %681 = vmatprep.subr.mxu0 0.0
    %682 = vmatpush1.msra.mxu0 %v418
    %683 = vmatprep.subr.mxu0 0.0
    %684 = vmatpush1.msra.mxu0 %v421
    %685 = vmatprep.subr.mxu0 0.0
    %686 = vmatpush1.msra.mxu0 %v424
    %687 = vmatprep.subr.mxu0 0.0
    %688 = vmatpush1.msra.mxu0 %v427
    %689 = vmatprep.subr.mxu0 0.0
    %690 = vmatpush1.msra.mxu0 0.0
    %691 = vmatprep.subr.mxu0 0.0
    %692 = vmatpush1.msra.mxu0 0.0
    %693 = vmatprep.subr.mxu0 0.0
    %694 = vmatpush1.msra.mxu0 0.0
    %695 = vmatprep.subr.mxu0 0.0
    %696 = vmatpush1.msra.mxu0 0.0
    %697 = vmatprep.subr.mxu0 0.0
    %698 = vmatpush1.msra.mxu0 0.0
    %699 = vmatprep.subr.mxu0 0.0
    %700 = vmatpush1.msra.mxu0 0.0
    %701 = vmatprep.subr.mxu0 0.0
    %702 = vmatpush1.msra.mxu0 0.0
    %703 = vmatprep.subr.mxu0 0.0
    %704 = vmatpush1.msra.mxu0 0.0
    %705 = vmatprep.subr.mxu0 0.0
    %706 = vmatpush1.msra.mxu0 0.0
    %707 = vmatprep.subr.mxu0 0.0
    %708 = vmatpush1.msra.mxu0 0.0
    %709 = vmatprep.subr.mxu0 0.0
    %710 = vmatpush1.msra.mxu0 0.0
    %711 = vmatprep.subr.mxu0 0.0
    %712 = vmatpush1.msra.mxu0 0.0
    %713 = vmatprep.subr.mxu0 0.0
    %714 = vmatpush1.msra.mxu0 0.0
    %715 = vmatprep.subr.mxu0 0.0
    %716 = vmatpush1.msra.mxu0 0.0
    %717 = vmatprep.subr.mxu0 0.0
    %718 = vmatpush1.msra.mxu0 0.0
    %719 = vmatprep.subr.mxu0 0.0
    %720 = vmatpush1.msra.mxu0 0.0
    %721 = vmatprep.mubr.f32.mxu0 0.0
    %722 = vmatmul.mubr.f32.gmra.mrb[0].mxu0 %v280
    %v723 = vpop.f32.mrb[0].mxu0
    %v724 = vadd.f32 %v649, %v723
    %v725 = vpop.f32.mrb[0].mxu0
    %726 = vmatprep.mubr.f32.mxu0 0.0
    %727 = vmatmul.mubr.f32.gmra.mrb[0].mxu0 %v283
    %v728 = vpop.f32.mrb[0].mxu0
    %v729 = vadd.f32 %v654, %v728
    %v730 = vpop.f32.mrb[0].mxu0
    %731 = vdwg.mxu0
    %v732 = vld [vmem:[%s3] sm:$0xff]
    %v733 = vld [vmem:[%s3 + $0x8] sm:$0xff]
    %v734 = vld [vmem:[%s3 + $0x10] sm:$0xff]
    %v735 = vld [vmem:[%s3 + $0x18] sm:$0xf]
    %v736 = vld [vmem:[%s3 + $0x20] sm:$0xf]
    %v737 = vld [vmem:[%s3 + $0x28] sm:$0xf]
    %v739 = vsel %vm49, %v735, 0
    %v742 = vsel %vm49, %v736, 0
    %v745 = vsel %vm49, %v737, 0
    %747 = vmatprep.subr.mxu0 %v733
    %748 = vmatpush1.msra.mxu0 %v732
    %749 = vmatprep.subr.mxu0 %v742
    %750 = vmatpush1.msra.mxu0 %v739
    %751 = vmatprep.subr.mxu0 0.0
    %752 = vmatpush1.msra.mxu0 0.0
    %753 = vmatprep.subr.mxu0 0.0
    %754 = vmatpush1.msra.mxu0 0.0
    %755 = vmatprep.subr.mxu0 0.0
    %756 = vmatpush1.msra.mxu0 0.0
    %757 = vmatprep.subr.mxu0 0.0
    %758 = vmatpush1.msra.mxu0 0.0
    %759 = vmatprep.subr.mxu0 0.0
    %760 = vmatpush1.msra.mxu0 0.0
    %761 = vmatprep.subr.mxu0 0.0
    %762 = vmatpush1.msra.mxu0 0.0
    %763 = vmatprep.subr.mxu0 0.0
    %764 = vmatpush1.msra.mxu0 0.0
    %765 = vmatprep.subr.mxu0 0.0
    %766 = vmatpush1.msra.mxu0 0.0
    %767 = vmatprep.subr.mxu0 0.0
    %768 = vmatpush1.msra.mxu0 0.0
    %769 = vmatprep.subr.mxu0 0.0
    %770 = vmatpush1.msra.mxu0 0.0
    %771 = vmatprep.subr.mxu0 0.0
    %772 = vmatpush1.msra.mxu0 0.0
    %773 = vmatprep.subr.mxu0 0.0
    %774 = vmatpush1.msra.mxu0 0.0
    %775 = vmatprep.subr.mxu0 0.0
    %776 = vmatpush1.msra.mxu0 0.0
    %777 = vmatprep.subr.mxu0 0.0
    %778 = vmatpush1.msra.mxu0 0.0
    %779 = vmatprep.subr.mxu0 0.0
    %780 = vmatpush1.msra.mxu0 0.0
    %781 = vmatprep.subr.mxu0 0.0
    %782 = vmatpush1.msra.mxu0 0.0
    %783 = vmatprep.subr.mxu0 0.0
    %784 = vmatpush1.msra.mxu0 0.0
    %785 = vmatprep.subr.mxu0 0.0
    %786 = vmatpush1.msra.mxu0 0.0
    %787 = vmatprep.subr.mxu0 0.0
    %788 = vmatpush1.msra.mxu0 0.0
    %789 = vmatprep.subr.mxu0 0.0
    %790 = vmatpush1.msra.mxu0 0.0
    %791 = vmatprep.subr.mxu0 0.0
    %792 = vmatpush1.msra.mxu0 0.0
    %793 = vmatprep.subr.mxu0 0.0
    %794 = vmatpush1.msra.mxu0 0.0
    %795 = vmatprep.subr.mxu0 0.0
    %796 = vmatpush1.msra.mxu0 0.0
    %797 = vmatprep.subr.mxu0 0.0
    %798 = vmatpush1.msra.mxu0 0.0
    %799 = vmatprep.subr.mxu0 0.0
    %800 = vmatpush1.msra.mxu0 0.0
    %801 = vmatprep.subr.mxu0 0.0
    %802 = vmatpush1.msra.mxu0 0.0
    %803 = vmatprep.subr.mxu0 0.0
    %804 = vmatpush1.msra.mxu0 0.0
    %805 = vmatprep.subr.mxu0 0.0
    %806 = vmatpush1.msra.mxu0 0.0
    %807 = vmatprep.subr.mxu0 0.0
    %808 = vmatpush1.msra.mxu0 0.0
    %809 = vmatprep.subr.mxu0 0.0
    %810 = vmatpush1.msra.mxu0 0.0
    %811 = vmatprep.mubr.f32.mxu0 0.0
    %812 = vmatmul.mubr.f32.gmra.mrb[0].mxu0 %v44
    %v813 = vpop.f32.mrb[0].mxu0
    %v814 = vadd.f32 0.0, %v813
    %v815 = vpop.f32.mrb[0].mxu0
    %v816 = vadd.f32 0.0, %v815
    %817 = vmatprep.mubr.f32.mxu0 0.0
    %818 = vmatmul.mubr.f32.gmra.mrb[0].mxu0 %v47
    %v819 = vpop.f32.mrb[0].mxu0
    %v820 = vadd.f32 0.0, %v819
    %v821 = vpop.f32.mrb[0].mxu0
    %v822 = vadd.f32 0.0, %v821
    %823 = vdwg.mxu0
    %824 = vmatprep.subr.mxu0 0.0
    %825 = vmatpush1.msra.mxu0 %v734
    %826 = vmatprep.subr.mxu0 0.0
    %827 = vmatpush1.msra.mxu0 %v745
    %828 = vmatprep.subr.mxu0 0.0
    %829 = vmatpush1.msra.mxu0 0.0
    %830 = vmatprep.subr.mxu0 0.0
    %831 = vmatpush1.msra.mxu0 0.0
    %832 = vmatprep.subr.mxu0 0.0
    %833 = vmatpush1.msra.mxu0 0.0
    %834 = vmatprep.subr.mxu0 0.0
    %835 = vmatpush1.msra.mxu0 0.0
    %836 = vmatprep.subr.mxu0 0.0
    %837 = vmatpush1.msra.mxu0 0.0
    %838 = vmatprep.subr.mxu0 0.0
    %839 = vmatpush1.msra.mxu0 0.0
    %840 = vmatprep.subr.mxu0 0.0
    %841 = vmatpush1.msra.mxu0 0.0
    %842 = vmatprep.subr.mxu0 0.0
    %843 = vmatpush1.msra.mxu0 0.0
    %844 = vmatprep.subr.mxu0 0.0
    %845 = vmatpush1.msra.mxu0 0.0
    %846 = vmatprep.subr.mxu0 0.0
    %847 = vmatpush1.msra.mxu0 0.0
    %848 = vmatprep.subr.mxu0 0.0
    %849 = vmatpush1.msra.mxu0 0.0
    %850 = vmatprep.subr.mxu0 0.0
    %851 = vmatpush1.msra.mxu0 0.0
    %852 = vmatprep.subr.mxu0 0.0
    %853 = vmatpush1.msra.mxu0 0.0
    %854 = vmatprep.subr.mxu0 0.0
    %855 = vmatpush1.msra.mxu0 0.0
    %856 = vmatprep.subr.mxu0 0.0
    %857 = vmatpush1.msra.mxu0 0.0
    %858 = vmatprep.subr.mxu0 0.0
    %859 = vmatpush1.msra.mxu0 0.0
    %860 = vmatprep.subr.mxu0 0.0
    %861 = vmatpush1.msra.mxu0 0.0
    %862 = vmatprep.subr.mxu0 0.0
    %863 = vmatpush1.msra.mxu0 0.0
    %864 = vmatprep.subr.mxu0 0.0
    %865 = vmatpush1.msra.mxu0 0.0
    %866 = vmatprep.subr.mxu0 0.0
    %867 = vmatpush1.msra.mxu0 0.0
    %868 = vmatprep.subr.mxu0 0.0
    %869 = vmatpush1.msra.mxu0 0.0
    %870 = vmatprep.subr.mxu0 0.0
    %871 = vmatpush1.msra.mxu0 0.0
    %872 = vmatprep.subr.mxu0 0.0
    %873 = vmatpush1.msra.mxu0 0.0
    %874 = vmatprep.subr.mxu0 0.0
    %875 = vmatpush1.msra.mxu0 0.0
    %876 = vmatprep.subr.mxu0 0.0
    %877 = vmatpush1.msra.mxu0 0.0
    %878 = vmatprep.subr.mxu0 0.0
    %879 = vmatpush1.msra.mxu0 0.0
    %880 = vmatprep.subr.mxu0 0.0
    %881 = vmatpush1.msra.mxu0 0.0
    %882 = vmatprep.subr.mxu0 0.0
    %883 = vmatpush1.msra.mxu0 0.0
    %884 = vmatprep.subr.mxu0 0.0
    %885 = vmatpush1.msra.mxu0 0.0
    %886 = vmatprep.subr.mxu0 0.0
    %887 = vmatpush1.msra.mxu0 0.0
    %888 = vmatprep.mubr.f32.mxu0 0.0
    %889 = vmatmul.mubr.f32.gmra.mrb[0].mxu0 %v44
    %v890 = vpop.f32.mrb[0].mxu0
    %v891 = vadd.f32 0.0, %v890
    %v892 = vpop.f32.mrb[0].mxu0
    %893 = vmatprep.mubr.f32.mxu0 0.0
    %894 = vmatmul.mubr.f32.gmra.mrb[0].mxu0 %v47
    %v895 = vpop.f32.mrb[0].mxu0
    %v896 = vadd.f32 0.0, %v895
    %v897 = vpop.f32.mrb[0].mxu0
    %898 = vdwg.mxu0
    %v899 = vld [vmem:[%s7] sm:$0x7]
    %v901 = vlaneseq
    %v902 = vshrl.u32 %v901, 7
    %v903 = vsub.s32 0, %v902
    %v904 = vrot.slane %v899, %v903
    %v905 = vlaneseq
    %v906 = vshrl.u32 %v905, 7
    %v907 = vsub.s32 1, %v906
    %v908 = vrot.slane %v899, %v907
    %v909 = vlaneseq
    %v910 = vshrl.u32 %v909, 7
    %v911 = vsub.s32 2, %v910
    %v912 = vrot.slane %v899, %v911
    %v916 = vmul.f32 %v572, %v904
    %v917 = vmul.f32 %v574, %v908
    %v918 = vmul.f32 %v724, %v912
    %v919 = vmul.f32 %v578, %v904
    %v920 = vmul.f32 %v580, %v908
    %v921 = vmul.f32 %v729, %v912
    %v922 = vld [vmem:[%s8] sm:$0x7]
    %v924 = vlaneseq
    %v925 = vshrl.u32 %v924, 7
    %v926 = vsub.s32 0, %v925
    %v927 = vrot.slane %v922, %v926
    %v928 = vlaneseq
    %v929 = vshrl.u32 %v928, 7
    %v930 = vsub.s32 1, %v929
    %v931 = vrot.slane %v922, %v930
    %v932 = vlaneseq
    %v933 = vshrl.u32 %v932, 7
    %v934 = vsub.s32 2, %v933
    %v935 = vrot.slane %v922, %v934
    %v939 = vadd.f32 %v916, %v927
    %v940 = vadd.f32 %v917, %v931
    %v941 = vadd.f32 %v918, %v935
    %v942 = vadd.f32 %v919, %v927
    %v943 = vadd.f32 %v920, %v931
    %v944 = vadd.f32 %v921, %v935
    %v945 = vadd.f32 %v939, %v814
    %v946 = vadd.f32 %v940, %v816
    %v947 = vadd.f32 %v941, %v891
    %v948 = vadd.f32 %v942, %v820
    %v949 = vadd.f32 %v943, %v822
    %v950 = vadd.f32 %v944, %v896
    %vm951 = vcmp.ge.f32.partialorder %v945, 0.0
    %vm952 = vcmp.ge.f32.partialorder %v946, 0.0
    %vm953 = vcmp.ge.f32.partialorder %v947, 0.0
    %vm954 = vcmp.ge.f32.partialorder %v948, 0.0
    %vm955 = vcmp.ge.f32.partialorder %v949, 0.0
    %vm956 = vcmp.ge.f32.partialorder %v950, 0.0
    %957 = vset.pattern.permute.xlu0 1
    %958 = vperm.xlu0 %957, %v267
    %v959 = vpop.permute.xlu0 %958
    %v961 = vmul.f32 %v959, %v945
    %v962 = vmul.f32 %v959, %v946
    %v963 = vmul.f32 %v959, %v947
    %v964 = vmul.f32 %v959, %v948
    %v965 = vmul.f32 %v959, %v949
    %v966 = vmul.f32 %v959, %v950
    %v967 = vsel %vm951, %v945, %v961
    %v968 = vsel %vm952, %v946, %v962
    %v969 = vsel %vm953, %v947, %v963
    %v970 = vsel %vm954, %v948, %v964
    %v971 = vsel %vm955, %v949, %v965
    %v972 = vsel %vm956, %v950, %v966
    %v973 = vmax.f32 %v967, %v968
    %v974 = vmax.f32 %v970, %v971
    %v975 = vmax.f32 %v973, %v969
    %v976 = vmax.f32 %v974, %v972
    %vm977 = vcmask 64512
    %978 = vst.msk [vmem:[#allocation2] sm:$0xff] %vm977, %v975
    %979 = vst.msk [vmem:[#allocation2 + $0x8] sm:$0xff] %vm977, %v976
    // Predicated region
    $region38: #{resblock_forward_nlc.5} parent=1 // pred_check
      _
    $region39: #{resblock_forward_nlc.5} parent=1 // pred_check_branch
      %981 = sbr.rel (0) target = $region41
    $region40: #{resblock_forward_nlc.5} parent=1 // pred_region
      %s983 = ssub.s32 256, 256
      %984 = vsyncadd [#allocation3], %s983
      %s985 = sshll.u32 [#allocation2], 4
      %s986 = int_to_ptr.vmem [resolvable:$true] %s985
      %991 = dma.vmem_to_hbm [thread:$0]  %s986, 256, %s9, [#allocation3], 128, 128, 8
    $region41: #{resblock_forward_nlc.5} parent=1 // pred_fallthru
      _
    // Predicated region
    $region42: #{resblock_forward_nlc.5} parent=1 // pred_check
      _
    $region43: #{resblock_forward_nlc.5} parent=1 // pred_check_branch
      %993 = sbr.rel (0) target = $region45
    $region44: #{resblock_forward_nlc.5} parent=1 // pred_region
      %994 = dma.done [#allocation3], 256
    $region45: #{resblock_forward_nlc.5} parent=1 // pred_fallthru
      _
    %995 = vsyncpa [#allocation3], 1

</llo_original>
